<compile_context>
chip_gen: v7x
topology: tpu7x:2x2x1
jax: 0.10.0
libtpu: 0.0.40
codegen_flags: <defaults>
</compile_context>

<pallas_src>
import functools

import numpy as np

import jax
import jax.numpy as jnp
from jax import lax
from jax.experimental import pallas as pl
from jax.experimental.pallas import tpu as pltpu


def _dwsep_kernel(x_ref, w_ref, mask_ref, b_ref, o_ref, *,
                  taps, bn, hw, mxu_dtype):
    """One grid step = `bn` batch images.

    x_ref   : (bn, C, HW)     images, channels on sublanes, pixels on lanes
    w_ref   : (K*K, OUT, C)   fused per-tap weights (pw * dw)
    mask_ref: (K*K, HW)       0/1 border-validity mask per tap
    b_ref   : (OUT, 1)        combined bias (dw bias folded through pw)
    o_ref   : (bn, OUT, HW)   output, lane-dense
    taps    : static tuple of (tap_index, lane_shift, mask_is_all_ones)
    """
    # Hoist the (tiny) per-tap weight / mask loads out of the per-image loop.
    w_taps = {t: w_ref[t].astype(mxu_dtype) for (t, _, _) in taps}
    m_taps = {t: mask_ref[t, :].reshape(1, hw)
              for (t, _, full) in taps if not full}
    bias = b_ref[...]                                       # (OUT, 1) f32

    for b in range(bn):
        x = x_ref[b]                                        # (C, HW) f32
        acc = None
        for (t, shift, full) in taps:                       # full-mask taps first
            xs = x if shift == 0 else pltpu.roll(x, shift, axis=1)   # XLU
            tap = jnp.dot(w_taps[t], xs.astype(mxu_dtype),            # MXU
                          preferred_element_type=jnp.float32)         # (OUT, HW)
            if not full:
                tap = tap * m_taps[t]                       # zero the border taps
            acc = tap if acc is None else acc + tap
        o_ref[b] = (acc + bias).astype(o_ref.dtype)


def depthwise_conv_pallas(x_nchw, dw_w, dw_b, pw_w, pw_b, *,
                          stride=1, padding=1, mxu_dtype=jnp.float32):
    """x_nchw: (N, C, H, W) f32 -> (N, OUT, H, W) f32.

    dw_w: (C, 1, K, K)   depthwise weights (PyTorch layout, groups=C)
    dw_b: (C,)           depthwise bias
    pw_w: (OUT, C, 1, 1) pointwise weights
    pw_b: (OUT,)         pointwise bias
    """
    N, C, H, W = x_nchw.shape
    OUT = pw_w.shape[0]
    K = dw_w.shape[-1]
    if stride != 1 or padding != (K - 1) // 2:
        raise NotImplementedError(
            "kernel implements the 'same' depthwise conv (stride=1, "
            "padding=(K-1)//2) used by MLIC++ DepthWiseConv")
    HW = H * W
    HW_pad = ((HW + 127) // 128) * 128        # keep output stores lane-dense

    # ---- fused weights / bias (tiny plain-JAX glue) ----
    dw_taps = dw_w[:, 0, :, :].reshape(C, K * K)                  # (C, KK)
    pw_oc = pw_w[:, :, 0, 0]                                      # (OUT, C)
    w_fused = (pw_oc[None, :, :] *
               jnp.transpose(dw_taps)[:, None, :]).astype(jnp.float32)  # (KK,OUT,C)
    b_comb = (pw_oc @ dw_b + pw_b).reshape(OUT, 1).astype(jnp.float32)  # (OUT, 1)

    # ---- static per-tap lane shifts + border masks (numpy, compile-time) ----
    masks = np.zeros((K * K, HW_pad), np.float32)
    hh = np.arange(H)[:, None]
    ww = np.arange(W)[None, :]
    taps = []
    for kh in range(K):
        for kw in range(K):
            t = kh * K + kw
            dh, dwc = kh - padding, kw - padding
            m = ((hh + dh >= 0) & (hh + dh < H) &
                 (ww + dwc >= 0) & (ww + dwc < W))
            masks[t, :HW] = m.reshape(-1).astype(np.float32)
            shift = (-(dh * W + dwc)) % HW_pad   # xs[i] = x[i + s] for valid pixels
            taps.append((t, int(shift), bool(m.all())))
    taps = tuple(sorted(taps, key=lambda tp: not tp[2]))   # all-ones masks first
    mask = jnp.asarray(masks)                               # (KK, HW_pad)

    # ---- NCHW kept; spatial flattened onto lanes (free, contiguous reshape) ----
    x_flat = x_nchw.reshape(N, C, HW)
    if HW_pad != HW:
        x_flat = jnp.pad(x_flat, ((0, 0), (0, 0), (0, HW_pad - HW)))

    # ---- batch Bn images per grid step to amortize per-step overhead ----
    target_block_bytes = 512 * 1024
    bn = max(1, min(N, target_block_bytes // max(1, C * HW_pad * 4)))
    while N % bn:                      # keep the grid exact, no batch padding
        bn -= 1
    # TODO(synk): if N // bn == 1 on v7x, add a parallel H-tile axis (1-row halo)
    #             so the second TensorCore gets work.

    kernel = functools.partial(_dwsep_kernel, taps=taps, bn=bn, hw=HW_pad,
                               mxu_dtype=mxu_dtype)

    # VMEM: double-buffered image/output blocks + resident weights/masks/bias,
    # capped well below v7x's 64 MiB physical VMEM.
    block_bytes = 4 * (2 * bn * C * HW_pad + 2 * bn * OUT * HW_pad +
                       2 * (K * K * (OUT * C + HW_pad) + OUT))
    vmem_limit = int(min(48 * 2**20, max(4 * 2**20, 2 * block_bytes)))

    out_flat = pl.pallas_call(
        kernel,
        out_shape=jax.ShapeDtypeStruct((N, OUT, HW_pad), jnp.float32),
        grid_spec=pltpu.PrefetchScalarGridSpec(
            num_scalar_prefetch=0,
            grid=(N // bn,),
            in_specs=[
                pl.BlockSpec((bn, C, HW_pad), lambda n: (n, 0, 0)),
                pl.BlockSpec((K * K, OUT, C), lambda n: (0, 0, 0)),
                pl.BlockSpec((K * K, HW_pad), lambda n: (0, 0)),
                pl.BlockSpec((OUT, 1), lambda n: (0, 0)),
            ],
            out_specs=pl.BlockSpec((bn, OUT, HW_pad), lambda n: (n, 0, 0)),
        ),
        compiler_params=pltpu.CompilerParams(
            dimension_semantics=("parallel",),
            vmem_limit_bytes=vmem_limit),
    )(x_flat, w_fused, mask, b_comb)

    if HW_pad != HW:
        out_flat = out_flat[:, :, :HW]
    # Already NCHW-ordered; just un-flatten the spatial dims (free reshape).
    return out_flat.reshape(N, OUT, H, W)


def depthwise_conv_ref(x_nchw, dw_w, dw_b, pw_w, pw_b, *, padding=1):
    """Pure-JAX reference using lax.conv_general_dilated (NCHW, like PyTorch)."""
    C = x_nchw.shape[1]
    out = lax.conv_general_dilated(
        x_nchw, dw_w, window_strides=(1, 1),
        padding=((padding, padding), (padding, padding)),
        feature_group_count=C,
        dimension_numbers=("NCHW", "OIHW", "NCHW"))
    out = out + dw_b.reshape(1, -1, 1, 1)
    out = lax.conv_general_dilated(
        out, pw_w, window_strides=(1, 1), padding=((0, 0), (0, 0)),
        dimension_numbers=("NCHW", "OIHW", "NCHW"))
    out = out + pw_b.reshape(1, -1, 1, 1)
    return out


if __name__ == "__main__":
    # Small, deterministic example consistent with the module's forward.
    N, C, H, W = 2, 4, 16, 16
    OUT_CH, K = 8, 3

    key = jax.random.PRNGKey(0)
    kx, k1, k2, k3, k4 = jax.random.split(key, 5)

    x = jax.random.normal(kx, (N, C, H, W), dtype=jnp.float32)
    dw_w = jax.random.normal(k1, (C, 1, K, K), dtype=jnp.float32) * 0.1
    dw_b = jax.random.normal(k2, (C,), dtype=jnp.float32) * 0.1
    pw_w = jax.random.normal(k3, (OUT_CH, C, 1, 1), dtype=jnp.float32) * 0.1
    pw_b = jax.random.normal(k4, (OUT_CH,), dtype=jnp.float32) * 0.1

    out = depthwise_conv_pallas(x, dw_w, dw_b, pw_w, pw_b)
    out = jax.block_until_ready(out)

    ref = depthwise_conv_ref(x, dw_w, dw_b, pw_w, pw_b)
    assert out.shape == (N, OUT_CH, H, W), out.shape
    max_err = float(jnp.max(jnp.abs(out - ref)))
    assert jnp.allclose(out, ref, atol=1e-4, rtol=1e-4), max_err

    print("KERNEL_OK")
</pallas_src>

<mosaic_0001>
module attributes {stable_mosaic.version = 11 : i64} {
  func.func @_dwsep_kernel(%arg0: i32, %arg1: memref<2x4x256xf32, #tpu.memory_space<vmem>>, %arg2: memref<9x8x4xf32, #tpu.memory_space<vmem>>, %arg3: memref<9x256xf32, #tpu.memory_space<vmem>>, %arg4: memref<8x1xf32, #tpu.memory_space<vmem>>, %arg5: memref<2x8x256xf32, #tpu.memory_space<vmem>>) attributes {dimension_semantics = [#tpu.dimension_semantics<parallel>], iteration_bounds = array<i64: 1>, scalar_prefetch = 0 : i64, scratch_operands = 0 : i64, tpu.core_type = #tpu.core_type<tc>, window_params = [{transform_indices = @transform_0, window_bounds = array<i64: 2, 4, 256>}, {pipeline_mode = #tpu.pipeline_mode<synchronous>, transform_indices = @transform_1, window_bounds = array<i64: 9, 8, 4>}, {pipeline_mode = #tpu.pipeline_mode<synchronous>, transform_indices = @transform_2, window_bounds = array<i64: 9, 256>}, {pipeline_mode = #tpu.pipeline_mode<synchronous>, transform_indices = @transform_3, window_bounds = array<i64: 8, 1>}, {transform_indices = @transform_4, window_bounds = array<i64: 2, 8, 256>}]} {
    %c4 = arith.constant 4 : index
    %c0 = arith.constant 0 : index
    %c0_0 = arith.constant 0 : index
    %0 = vector.load %arg2[%c4, %c0, %c0_0] : memref<9x8x4xf32, #tpu.memory_space<vmem>>, vector<1x8x4xf32>
    %1 = vector.shape_cast %0 : vector<1x8x4xf32> to vector<8x4xf32>
    %c0_1 = arith.constant 0 : index
    %c0_2 = arith.constant 0 : index
    %c0_3 = arith.constant 0 : index
    %2 = vector.load %arg2[%c0_1, %c0_2, %c0_3] : memref<9x8x4xf32, #tpu.memory_space<vmem>>, vector<1x8x4xf32>
    %3 = vector.shape_cast %2 : vector<1x8x4xf32> to vector<8x4xf32>
    %c1 = arith.constant 1 : index
    %c0_4 = arith.constant 0 : index
    %c0_5 = arith.constant 0 : index
    %4 = vector.load %arg2[%c1, %c0_4, %c0_5] : memref<9x8x4xf32, #tpu.memory_space<vmem>>, vector<1x8x4xf32>
    %5 = vector.shape_cast %4 : vector<1x8x4xf32> to vector<8x4xf32>
    %c2 = arith.constant 2 : index
    %c0_6 = arith.constant 0 : index
    %c0_7 = arith.constant 0 : index
    %6 = vector.load %arg2[%c2, %c0_6, %c0_7] : memref<9x8x4xf32, #tpu.memory_space<vmem>>, vector<1x8x4xf32>
    %7 = vector.shape_cast %6 : vector<1x8x4xf32> to vector<8x4xf32>
    %c3 = arith.constant 3 : index
    %c0_8 = arith.constant 0 : index
    %c0_9 = arith.constant 0 : index
    %8 = vector.load %arg2[%c3, %c0_8, %c0_9] : memref<9x8x4xf32, #tpu.memory_space<vmem>>, vector<1x8x4xf32>
    %9 = vector.shape_cast %8 : vector<1x8x4xf32> to vector<8x4xf32>
    %c5 = arith.constant 5 : index
    %c0_10 = arith.constant 0 : index
    %c0_11 = arith.constant 0 : index
    %10 = vector.load %arg2[%c5, %c0_10, %c0_11] : memref<9x8x4xf32, #tpu.memory_space<vmem>>, vector<1x8x4xf32>
    %11 = vector.shape_cast %10 : vector<1x8x4xf32> to vector<8x4xf32>
    %c6 = arith.constant 6 : index
    %c0_12 = arith.constant 0 : index
    %c0_13 = arith.constant 0 : index
    %12 = vector.load %arg2[%c6, %c0_12, %c0_13] : memref<9x8x4xf32, #tpu.memory_space<vmem>>, vector<1x8x4xf32>
    %13 = vector.shape_cast %12 : vector<1x8x4xf32> to vector<8x4xf32>
    %c7 = arith.constant 7 : index
    %c0_14 = arith.constant 0 : index
    %c0_15 = arith.constant 0 : index
    %14 = vector.load %arg2[%c7, %c0_14, %c0_15] : memref<9x8x4xf32, #tpu.memory_space<vmem>>, vector<1x8x4xf32>
    %15 = vector.shape_cast %14 : vector<1x8x4xf32> to vector<8x4xf32>
    %c8 = arith.constant 8 : index
    %c0_16 = arith.constant 0 : index
    %c0_17 = arith.constant 0 : index
    %16 = vector.load %arg2[%c8, %c0_16, %c0_17] : memref<9x8x4xf32, #tpu.memory_space<vmem>>, vector<1x8x4xf32>
    %17 = vector.shape_cast %16 : vector<1x8x4xf32> to vector<8x4xf32>
    %c0_18 = arith.constant 0 : index
    %c0_19 = arith.constant 0 : index
    %18 = vector.load %arg3[%c0_18, %c0_19] : memref<9x256xf32, #tpu.memory_space<vmem>>, vector<1x256xf32>
    %19 = vector.shape_cast %18 : vector<1x256xf32> to vector<256xf32>
    %20 = vector.shape_cast %19 : vector<256xf32> to vector<1x256xf32>
    %c1_20 = arith.constant 1 : index
    %c0_21 = arith.constant 0 : index
    %21 = vector.load %arg3[%c1_20, %c0_21] : memref<9x256xf32, #tpu.memory_space<vmem>>, vector<1x256xf32>
    %22 = vector.shape_cast %21 : vector<1x256xf32> to vector<256xf32>
    %23 = vector.shape_cast %22 : vector<256xf32> to vector<1x256xf32>
    %c2_22 = arith.constant 2 : index
    %c0_23 = arith.constant 0 : index
    %24 = vector.load %arg3[%c2_22, %c0_23] : memref<9x256xf32, #tpu.memory_space<vmem>>, vector<1x256xf32>
    %25 = vector.shape_cast %24 : vector<1x256xf32> to vector<256xf32>
    %26 = vector.shape_cast %25 : vector<256xf32> to vector<1x256xf32>
    %c3_24 = arith.constant 3 : index
    %c0_25 = arith.constant 0 : index
    %27 = vector.load %arg3[%c3_24, %c0_25] : memref<9x256xf32, #tpu.memory_space<vmem>>, vector<1x256xf32>
    %28 = vector.shape_cast %27 : vector<1x256xf32> to vector<256xf32>
    %29 = vector.shape_cast %28 : vector<256xf32> to vector<1x256xf32>
    %c5_26 = arith.constant 5 : index
    %c0_27 = arith.constant 0 : index
    %30 = vector.load %arg3[%c5_26, %c0_27] : memref<9x256xf32, #tpu.memory_space<vmem>>, vector<1x256xf32>
    %31 = vector.shape_cast %30 : vector<1x256xf32> to vector<256xf32>
    %32 = vector.shape_cast %31 : vector<256xf32> to vector<1x256xf32>
    %c6_28 = arith.constant 6 : index
    %c0_29 = arith.constant 0 : index
    %33 = vector.load %arg3[%c6_28, %c0_29] : memref<9x256xf32, #tpu.memory_space<vmem>>, vector<1x256xf32>
    %34 = vector.shape_cast %33 : vector<1x256xf32> to vector<256xf32>
    %35 = vector.shape_cast %34 : vector<256xf32> to vector<1x256xf32>
    %c7_30 = arith.constant 7 : index
    %c0_31 = arith.constant 0 : index
    %36 = vector.load %arg3[%c7_30, %c0_31] : memref<9x256xf32, #tpu.memory_space<vmem>>, vector<1x256xf32>
    %37 = vector.shape_cast %36 : vector<1x256xf32> to vector<256xf32>
    %38 = vector.shape_cast %37 : vector<256xf32> to vector<1x256xf32>
    %c8_32 = arith.constant 8 : index
    %c0_33 = arith.constant 0 : index
    %39 = vector.load %arg3[%c8_32, %c0_33] : memref<9x256xf32, #tpu.memory_space<vmem>>, vector<1x256xf32>
    %40 = vector.shape_cast %39 : vector<1x256xf32> to vector<256xf32>
    %41 = vector.shape_cast %40 : vector<256xf32> to vector<1x256xf32>
    %c0_34 = arith.constant 0 : index
    %c0_35 = arith.constant 0 : index
    %42 = vector.load %arg4[%c0_34, %c0_35] : memref<8x1xf32, #tpu.memory_space<vmem>>, vector<8x1xf32>
    %c0_36 = arith.constant 0 : index
    %c0_37 = arith.constant 0 : index
    %c0_38 = arith.constant 0 : index
    %43 = vector.load %arg1[%c0_36, %c0_37, %c0_38] : memref<2x4x256xf32, #tpu.memory_space<vmem>>, vector<1x4x256xf32>
    %44 = vector.shape_cast %43 : vector<1x4x256xf32> to vector<4x256xf32>
    %cst = arith.constant dense<0.000000e+00> : vector<8x256xf32>
    %45 = tpu.matmul %1, %44, %cst {dimension_numbers = #tpu.dot_dimension_numbers<[1], [0], [0], [1], [0, 0, 1, 1], [], []>} : vector<8x4xf32>, vector<4x256xf32>, vector<8x256xf32> -> vector<8x256xf32>
    %c17_i32 = arith.constant 17 : i32
    %46 = tpu.dynamic_rotate %44 by %c17_i32 dim 1 : vector<4x256xf32>, i32 -> vector<4x256xf32>
    %cst_39 = arith.constant dense<0.000000e+00> : vector<8x256xf32>
    %47 = tpu.matmul %3, %46, %cst_39 {dimension_numbers = #tpu.dot_dimension_numbers<[1], [0], [0], [1], [0, 0, 1, 1], [], []>} : vector<8x4xf32>, vector<4x256xf32>, vector<8x256xf32> -> vector<8x256xf32>
    %48 = vector.broadcast %20 : vector<1x256xf32> to vector<8x256xf32>
    %49 = arith.mulf %47, %48 : vector<8x256xf32>
    %50 = arith.addf %45, %49 : vector<8x256xf32>
    %c16_i32 = arith.constant 16 : i32
    %51 = tpu.dynamic_rotate %44 by %c16_i32 dim 1 : vector<4x256xf32>, i32 -> vector<4x256xf32>
    %cst_40 = arith.constant dense<0.000000e+00> : vector<8x256xf32>
    %52 = tpu.matmul %5, %51, %cst_40 {dimension_numbers = #tpu.dot_dimension_numbers<[1], [0], [0], [1], [0, 0, 1, 1], [], []>} : vector<8x4xf32>, vector<4x256xf32>, vector<8x256xf32> -> vector<8x256xf32>
    %53 = vector.broadcast %23 : vector<1x256xf32> to vector<8x256xf32>
    %54 = arith.mulf %52, %53 : vector<8x256xf32>
    %55 = arith.addf %50, %54 : vector<8x256xf32>
    %c15_i32 = arith.constant 15 : i32
    %56 = tpu.dynamic_rotate %44 by %c15_i32 dim 1 : vector<4x256xf32>, i32 -> vector<4x256xf32>
    %cst_41 = arith.constant dense<0.000000e+00> : vector<8x256xf32>
    %57 = tpu.matmul %7, %56, %cst_41 {dimension_numbers = #tpu.dot_dimension_numbers<[1], [0], [0], [1], [0, 0, 1, 1], [], []>} : vector<8x4xf32>, vector<4x256xf32>, vector<8x256xf32> -> vector<8x256xf32>
    %58 = vector.broadcast %26 : vector<1x256xf32> to vector<8x256xf32>
    %59 = arith.mulf %57, %58 : vector<8x256xf32>
    %60 = arith.addf %55, %59 : vector<8x256xf32>
    %c1_i32 = arith.constant 1 : i32
    %61 = tpu.dynamic_rotate %44 by %c1_i32 dim 1 : vector<4x256xf32>, i32 -> vector<4x256xf32>
    %cst_42 = arith.constant dense<0.000000e+00> : vector<8x256xf32>
    %62 = tpu.matmul %9, %61, %cst_42 {dimension_numbers = #tpu.dot_dimension_numbers<[1], [0], [0], [1], [0, 0, 1, 1], [], []>} : vector<8x4xf32>, vector<4x256xf32>, vector<8x256xf32> -> vector<8x256xf32>
    %63 = vector.broadcast %29 : vector<1x256xf32> to vector<8x256xf32>
    %64 = arith.mulf %62, %63 : vector<8x256xf32>
    %65 = arith.addf %60, %64 : vector<8x256xf32>
    %c255_i32 = arith.constant 255 : i32
    %66 = tpu.dynamic_rotate %44 by %c255_i32 dim 1 : vector<4x256xf32>, i32 -> vector<4x256xf32>
    %cst_43 = arith.constant dense<0.000000e+00> : vector<8x256xf32>
    %67 = tpu.matmul %11, %66, %cst_43 {dimension_numbers = #tpu.dot_dimension_numbers<[1], [0], [0], [1], [0, 0, 1, 1], [], []>} : vector<8x4xf32>, vector<4x256xf32>, vector<8x256xf32> -> vector<8x256xf32>
    %68 = vector.broadcast %32 : vector<1x256xf32> to vector<8x256xf32>
    %69 = arith.mulf %67, %68 : vector<8x256xf32>
    %70 = arith.addf %65, %69 : vector<8x256xf32>
    %c241_i32 = arith.constant 241 : i32
    %71 = tpu.dynamic_rotate %44 by %c241_i32 dim 1 : vector<4x256xf32>, i32 -> vector<4x256xf32>
    %cst_44 = arith.constant dense<0.000000e+00> : vector<8x256xf32>
    %72 = tpu.matmul %13, %71, %cst_44 {dimension_numbers = #tpu.dot_dimension_numbers<[1], [0], [0], [1], [0, 0, 1, 1], [], []>} : vector<8x4xf32>, vector<4x256xf32>, vector<8x256xf32> -> vector<8x256xf32>
    %73 = vector.broadcast %35 : vector<1x256xf32> to vector<8x256xf32>
    %74 = arith.mulf %72, %73 : vector<8x256xf32>
    %75 = arith.addf %70, %74 : vector<8x256xf32>
    %c240_i32 = arith.constant 240 : i32
    %76 = tpu.dynamic_rotate %44 by %c240_i32 dim 1 : vector<4x256xf32>, i32 -> vector<4x256xf32>
    %cst_45 = arith.constant dense<0.000000e+00> : vector<8x256xf32>
    %77 = tpu.matmul %15, %76, %cst_45 {dimension_numbers = #tpu.dot_dimension_numbers<[1], [0], [0], [1], [0, 0, 1, 1], [], []>} : vector<8x4xf32>, vector<4x256xf32>, vector<8x256xf32> -> vector<8x256xf32>
    %78 = vector.broadcast %38 : vector<1x256xf32> to vector<8x256xf32>
    %79 = arith.mulf %77, %78 : vector<8x256xf32>
    %80 = arith.addf %75, %79 : vector<8x256xf32>
    %c239_i32 = arith.constant 239 : i32
    %81 = tpu.dynamic_rotate %44 by %c239_i32 dim 1 : vector<4x256xf32>, i32 -> vector<4x256xf32>
    %cst_46 = arith.constant dense<0.000000e+00> : vector<8x256xf32>
    %82 = tpu.matmul %17, %81, %cst_46 {dimension_numbers = #tpu.dot_dimension_numbers<[1], [0], [0], [1], [0, 0, 1, 1], [], []>} : vector<8x4xf32>, vector<4x256xf32>, vector<8x256xf32> -> vector<8x256xf32>
    %83 = vector.broadcast %41 : vector<1x256xf32> to vector<8x256xf32>
    %84 = arith.mulf %82, %83 : vector<8x256xf32>
    %85 = arith.addf %80, %84 : vector<8x256xf32>
    %86 = vector.broadcast %42 : vector<8x1xf32> to vector<8x256xf32>
    %87 = arith.addf %85, %86 : vector<8x256xf32>
    %c0_47 = arith.constant 0 : index
    %c0_48 = arith.constant 0 : index
    %c0_49 = arith.constant 0 : index
    %88 = vector.load %arg5[%c0_47, %c0_48, %c0_49] : memref<2x8x256xf32, #tpu.memory_space<vmem>>, vector<1x8x256xf32>
    %89 = vector.shape_cast %88 : vector<1x8x256xf32> to vector<8x256xf32>
    %90 = vector.shape_cast %87 : vector<8x256xf32> to vector<1x8x256xf32>
    tpu.vector_store %arg5[%c0_47, %c0_48, %c0_49], %90 {strides = array<i32>} : memref<2x8x256xf32, #tpu.memory_space<vmem>>, vector<1x8x256xf32>,
    %c1_50 = arith.constant 1 : index
    %c0_51 = arith.constant 0 : index
    %c0_52 = arith.constant 0 : index
    %91 = vector.load %arg1[%c1_50, %c0_51, %c0_52] : memref<2x4x256xf32, #tpu.memory_space<vmem>>, vector<1x4x256xf32>
    %92 = vector.shape_cast %91 : vector<1x4x256xf32> to vector<4x256xf32>
    %cst_53 = arith.constant dense<0.000000e+00> : vector<8x256xf32>
    %93 = tpu.matmul %1, %92, %cst_53 {dimension_numbers = #tpu.dot_dimension_numbers<[1], [0], [0], [1], [0, 0, 1, 1], [], []>} : vector<8x4xf32>, vector<4x256xf32>, vector<8x256xf32> -> vector<8x256xf32>
    %c17_i32_54 = arith.constant 17 : i32
    %94 = tpu.dynamic_rotate %92 by %c17_i32_54 dim 1 : vector<4x256xf32>, i32 -> vector<4x256xf32>
    %cst_55 = arith.constant dense<0.000000e+00> : vector<8x256xf32>
    %95 = tpu.matmul %3, %94, %cst_55 {dimension_numbers = #tpu.dot_dimension_numbers<[1], [0], [0], [1], [0, 0, 1, 1], [], []>} : vector<8x4xf32>, vector<4x256xf32>, vector<8x256xf32> -> vector<8x256xf32>
    %96 = vector.broadcast %20 : vector<1x256xf32> to vector<8x256xf32>
    %97 = arith.mulf %95, %96 : vector<8x256xf32>
    %98 = arith.addf %93, %97 : vector<8x256xf32>
    %c16_i32_56 = arith.constant 16 : i32
    %99 = tpu.dynamic_rotate %92 by %c16_i32_56 dim 1 : vector<4x256xf32>, i32 -> vector<4x256xf32>
    %cst_57 = arith.constant dense<0.000000e+00> : vector<8x256xf32>
    %100 = tpu.matmul %5, %99, %cst_57 {dimension_numbers = #tpu.dot_dimension_numbers<[1], [0], [0], [1], [0, 0, 1, 1], [], []>} : vector<8x4xf32>, vector<4x256xf32>, vector<8x256xf32> -> vector<8x256xf32>
    %101 = vector.broadcast %23 : vector<1x256xf32> to vector<8x256xf32>
    %102 = arith.mulf %100, %101 : vector<8x256xf32>
    %103 = arith.addf %98, %102 : vector<8x256xf32>
    %c15_i32_58 = arith.constant 15 : i32
    %104 = tpu.dynamic_rotate %92 by %c15_i32_58 dim 1 : vector<4x256xf32>, i32 -> vector<4x256xf32>
    %cst_59 = arith.constant dense<0.000000e+00> : vector<8x256xf32>
    %105 = tpu.matmul %7, %104, %cst_59 {dimension_numbers = #tpu.dot_dimension_numbers<[1], [0], [0], [1], [0, 0, 1, 1], [], []>} : vector<8x4xf32>, vector<4x256xf32>, vector<8x256xf32> -> vector<8x256xf32>
    %106 = vector.broadcast %26 : vector<1x256xf32> to vector<8x256xf32>
    %107 = arith.mulf %105, %106 : vector<8x256xf32>
    %108 = arith.addf %103, %107 : vector<8x256xf32>
    %c1_i32_60 = arith.constant 1 : i32
    %109 = tpu.dynamic_rotate %92 by %c1_i32_60 dim 1 : vector<4x256xf32>, i32 -> vector<4x256xf32>
    %cst_61 = arith.constant dense<0.000000e+00> : vector<8x256xf32>
    %110 = tpu.matmul %9, %109, %cst_61 {dimension_numbers = #tpu.dot_dimension_numbers<[1], [0], [0], [1], [0, 0, 1, 1], [], []>} : vector<8x4xf32>, vector<4x256xf32>, vector<8x256xf32> -> vector<8x256xf32>
    %111 = vector.broadcast %29 : vector<1x256xf32> to vector<8x256xf32>
    %112 = arith.mulf %110, %111 : vector<8x256xf32>
    %113 = arith.addf %108, %112 : vector<8x256xf32>
    %c255_i32_62 = arith.constant 255 : i32
    %114 = tpu.dynamic_rotate %92 by %c255_i32_62 dim 1 : vector<4x256xf32>, i32 -> vector<4x256xf32>
    %cst_63 = arith.constant dense<0.000000e+00> : vector<8x256xf32>
    %115 = tpu.matmul %11, %114, %cst_63 {dimension_numbers = #tpu.dot_dimension_numbers<[1], [0], [0], [1], [0, 0, 1, 1], [], []>} : vector<8x4xf32>, vector<4x256xf32>, vector<8x256xf32> -> vector<8x256xf32>
    %116 = vector.broadcast %32 : vector<1x256xf32> to vector<8x256xf32>
    %117 = arith.mulf %115, %116 : vector<8x256xf32>
    %118 = arith.addf %113, %117 : vector<8x256xf32>
    %c241_i32_64 = arith.constant 241 : i32
    %119 = tpu.dynamic_rotate %92 by %c241_i32_64 dim 1 : vector<4x256xf32>, i32 -> vector<4x256xf32>
    %cst_65 = arith.constant dense<0.000000e+00> : vector<8x256xf32>
    %120 = tpu.matmul %13, %119, %cst_65 {dimension_numbers = #tpu.dot_dimension_numbers<[1], [0], [0], [1], [0, 0, 1, 1], [], []>} : vector<8x4xf32>, vector<4x256xf32>, vector<8x256xf32> -> vector<8x256xf32>
    %121 = vector.broadcast %35 : vector<1x256xf32> to vector<8x256xf32>
    %122 = arith.mulf %120, %121 : vector<8x256xf32>
    %123 = arith.addf %118, %122 : vector<8x256xf32>
    %c240_i32_66 = arith.constant 240 : i32
    %124 = tpu.dynamic_rotate %92 by %c240_i32_66 dim 1 : vector<4x256xf32>, i32 -> vector<4x256xf32>
    %cst_67 = arith.constant dense<0.000000e+00> : vector<8x256xf32>
    %125 = tpu.matmul %15, %124, %cst_67 {dimension_numbers = #tpu.dot_dimension_numbers<[1], [0], [0], [1], [0, 0, 1, 1], [], []>} : vector<8x4xf32>, vector<4x256xf32>, vector<8x256xf32> -> vector<8x256xf32>
    %126 = vector.broadcast %38 : vector<1x256xf32> to vector<8x256xf32>
    %127 = arith.mulf %125, %126 : vector<8x256xf32>
    %128 = arith.addf %123, %127 : vector<8x256xf32>
    %c239_i32_68 = arith.constant 239 : i32
    %129 = tpu.dynamic_rotate %92 by %c239_i32_68 dim 1 : vector<4x256xf32>, i32 -> vector<4x256xf32>
    %cst_69 = arith.constant dense<0.000000e+00> : vector<8x256xf32>
    %130 = tpu.matmul %17, %129, %cst_69 {dimension_numbers = #tpu.dot_dimension_numbers<[1], [0], [0], [1], [0, 0, 1, 1], [], []>} : vector<8x4xf32>, vector<4x256xf32>, vector<8x256xf32> -> vector<8x256xf32>
    %131 = vector.broadcast %41 : vector<1x256xf32> to vector<8x256xf32>
    %132 = arith.mulf %130, %131 : vector<8x256xf32>
    %133 = arith.addf %128, %132 : vector<8x256xf32>
    %134 = vector.broadcast %42 : vector<8x1xf32> to vector<8x256xf32>
    %135 = arith.addf %133, %134 : vector<8x256xf32>
    %c1_70 = arith.constant 1 : index
    %c0_71 = arith.constant 0 : index
    %c0_72 = arith.constant 0 : index
    %136 = vector.load %arg5[%c1_70, %c0_71, %c0_72] : memref<2x8x256xf32, #tpu.memory_space<vmem>>, vector<1x8x256xf32>
    %137 = vector.shape_cast %136 : vector<1x8x256xf32> to vector<8x256xf32>
    %138 = vector.shape_cast %135 : vector<8x256xf32> to vector<1x8x256xf32>
    tpu.vector_store %arg5[%c1_70, %c0_71, %c0_72], %138 {strides = array<i32>} : memref<2x8x256xf32, #tpu.memory_space<vmem>>, vector<1x8x256xf32>,
    return
  }
  func.func @transform_0(%arg0: i32) -> (i32, i32, i32) {
    %c0_i32 = arith.constant 0 : i32
    %c0_i32_0 = arith.constant 0 : i32
    %c0_i32_1 = arith.constant 0 : i32
    return %arg0, %c0_i32, %c0_i32_0 : i32, i32, i32
  }
  func.func @transform_1(%arg0: i32) -> (i32, i32, i32) {
    %c0_i32 = arith.constant 0 : i32
    %c0_i32_0 = arith.constant 0 : i32
    %c0_i32_1 = arith.constant 0 : i32
    %c0_i32_2 = arith.constant 0 : i32
    return %c0_i32, %c0_i32_0, %c0_i32_1 : i32, i32, i32
  }
  func.func @transform_2(%arg0: i32) -> (i32, i32) {
    %c0_i32 = arith.constant 0 : i32
    %c0_i32_0 = arith.constant 0 : i32
    %c0_i32_1 = arith.constant 0 : i32
    return %c0_i32, %c0_i32_0 : i32, i32
  }
  func.func @transform_3(%arg0: i32) -> (i32, i32) {
    %c0_i32 = arith.constant 0 : i32
    %c0_i32_0 = arith.constant 0 : i32
    %c0_i32_1 = arith.constant 0 : i32
    return %c0_i32, %c0_i32_0 : i32, i32
  }
  func.func @transform_4(%arg0: i32) -> (i32, i32, i32) {
    %c0_i32 = arith.constant 0 : i32
    %c0_i32_0 = arith.constant 0 : i32
    %c0_i32_1 = arith.constant 0 : i32
    return %arg0, %c0_i32, %c0_i32_0 : i32, i32, i32
  }
}

</mosaic_0001>

<llo_original>
// kernel: tpu_custom_call.1
$region0: #{tpu_custom_call.1}
  #allocation0 [shape = 'u32[]', space=smem, size = 0x4, offset = 0x4, fixed_abs, tag = 'smem constant byte address 0x4 - core index']
  #allocation1 [shape = 'u32[144,128]{1,0:T(1,128)}', space=vmem, size = 0x12000, scoped, tag = 'internal scratch']
  %s0 = inlined_call_operand.vmem [shape: f32[2,4,256], index: 0, kind: input, shape index: {}]
  %s1 = inlined_call_operand.vmem [shape: f32[9,8,4], index: 1, kind: input, shape index: {}]
  %s2 = inlined_call_operand.vmem [shape: f32[9,256], index: 2, kind: input, shape index: {}]
  %s3 = inlined_call_operand.vmem [shape: f32[8,1], index: 3, kind: input, shape index: {}]
  %s4 = inlined_call_operand.hbm [shape: f32[2,8,256], index: 4, kind: output, shape index: {}]
  %s5 = sld [smem:[#allocation0]]
  $region26: #{tpu_custom_call.1} parent=0
    _
  %s7 = ssub.s32 1, %s5
  %s8 = scalar_select 0, %s7, %s5
  $region1: #{tpu_custom_call.1} parent=0
    #allocation2 [shape = 'u8[16384]{0}', space=vmem, size = 0x4000, scoped, tag = 'output window, operand 0, single buffered']
    #allocation3 [shape = 's32[1]{0}', space=sflag, size = 0x4, scoped, tag = 'scoped memory for tpu_custom_call.1']
    %9 = vsyncpa [#allocation3], 0
    // Predicated region
    $region2: #{tpu_custom_call.1} parent=1 // pred_check
      _
    $region3: #{tpu_custom_call.1} parent=1 // pred_check_branch
      %11 = sbr.rel (0) target = $region5
    $region4: #{tpu_custom_call.1} parent=1 // pred_region
      _
    $region5: #{tpu_custom_call.1} parent=1 // pred_fallthru
      _
    // Predicated region
    $region6: #{tpu_custom_call.1} parent=1 // pred_check
      _
    $region7: #{tpu_custom_call.1} parent=1 // pred_check_branch
      %13 = sbr.rel (0) target = $region9
    $region8: #{tpu_custom_call.1} parent=1 // pred_region
      _
    $region9: #{tpu_custom_call.1} parent=1 // pred_fallthru
      _
    // Predicated region
    $region10: #{tpu_custom_call.1} parent=1 // pred_check
      _
    $region11: #{tpu_custom_call.1} parent=1 // pred_check_branch
      %15 = sbr.rel (0) target = $region13
    $region12: #{tpu_custom_call.1} parent=1 // pred_region
      _
    $region13: #{tpu_custom_call.1} parent=1 // pred_fallthru
      _
    // Predicated region
    $region14: #{tpu_custom_call.1} parent=1 // pred_check
      _
    $region15: #{tpu_custom_call.1} parent=1 // pred_check_branch
      %17 = sbr.rel (0) target = $region17
    $region16: #{tpu_custom_call.1} parent=1 // pred_region
      _
    $region17: #{tpu_custom_call.1} parent=1 // pred_fallthru
      _
    %s18 = scalar_lea.vmem %s1, 32
    %v19 = vld [vmem:[%s18] sm:$0xff]
    %v20 = vld [vmem:[%s1] sm:$0xff]
    %s21 = scalar_lea.vmem %s1, 8
    %v22 = vld [vmem:[%s21] sm:$0xff]
    %s23 = scalar_lea.vmem %s1, 16
    %v24 = vld [vmem:[%s23] sm:$0xff]
    %s25 = scalar_lea.vmem %s1, 24
    %v26 = vld [vmem:[%s25] sm:$0xff]
    %s27 = scalar_lea.vmem %s1, 40
    %v28 = vld [vmem:[%s27] sm:$0xff]
    %s29 = scalar_lea.vmem %s1, 48
    %v30 = vld [vmem:[%s29] sm:$0xff]
    %s31 = scalar_lea.vmem %s1, 56
    %v32 = vld [vmem:[%s31] sm:$0xff]
    %s33 = scalar_lea.vmem %s1, 64
    %v34 = vld [vmem:[%s33] sm:$0xff]
    %v35 = vld [vmem:[%s2] ss:$8 sm:$0x3]
    %s36 = scalar_lea.vmem %s2, 1
    %v37 = vld [vmem:[%s36] ss:$8 sm:$0x3]
    %s38 = scalar_lea.vmem %s2, 2
    %v39 = vld [vmem:[%s38] ss:$8 sm:$0x3]
    %s40 = scalar_lea.vmem %s2, 3
    %v41 = vld [vmem:[%s40] ss:$8 sm:$0x3]
    %s42 = scalar_lea.vmem %s2, 5
    %v43 = vld [vmem:[%s42] ss:$8 sm:$0x3]
    %s44 = scalar_lea.vmem %s2, 6
    %v45 = vld [vmem:[%s44] ss:$8 sm:$0x3]
    %s46 = scalar_lea.vmem %s2, 7
    %v47 = vld [vmem:[%s46] ss:$8 sm:$0x3]
    %s48 = scalar_lea.vmem %s2, 16
    %v49 = vld [vmem:[%s48] ss:$8 sm:$0x3]
    %v50 = vld [vmem:[%s3] sm:$0xff]
    %v51 = vld [vmem:[%s0] sm:$0xff]
    %v53 = vcombine.high %v51, %v51
    %55 = vrot.lane.b32.xlu0 %v51, 17
    %v56 = vpop.permute.xlu0 %55
    %57 = vrot.lane.b32.xlu0 %v53, 17
    %v58 = vpop.permute.xlu0 %57
    %v59 = vlaneseq
    %v60 = vand.u32 %v59, 127
    %vm61 = vcmp.lt.s32.totalorder %v60, 17
    %v62 = vsel %vm61, %v56, %v58
    %v63 = vsel %vm61, %v58, %v56
    %vm64 = vcmask 31744
    %v66 = vsel %vm64, %v20, 0
    %vm68 = vcmask 1043456
    %v70 = vsel %vm68, %v63, 0
    %v73 = vsel %vm68, %v62, 0
    %75 = vmatprep.subr.mxu0 %v73
    %76 = vmatpush1.msra.mxu0 %v70
    %77 = vmatprep.subr.mxu0 0.0
    %78 = vmatpush1.msra.mxu0 0.0
    %79 = vmatprep.subr.mxu0 0.0
    %80 = vmatpush1.msra.mxu0 0.0
    %81 = vmatprep.subr.mxu0 0.0
    %82 = vmatpush1.msra.mxu0 0.0
    %83 = vmatprep.subr.mxu0 0.0
    %84 = vmatpush1.msra.mxu0 0.0
    %85 = vmatprep.subr.mxu0 0.0
    %86 = vmatpush1.msra.mxu0 0.0
    %87 = vmatprep.subr.mxu0 0.0
    %88 = vmatpush1.msra.mxu0 0.0
    %89 = vmatprep.subr.mxu0 0.0
    %90 = vmatpush1.msra.mxu0 0.0
    %91 = vmatprep.subr.mxu0 0.0
    %92 = vmatpush1.msra.mxu0 0.0
    %93 = vmatprep.subr.mxu0 0.0
    %94 = vmatpush1.msra.mxu0 0.0
    %95 = vmatprep.subr.mxu0 0.0
    %96 = vmatpush1.msra.mxu0 0.0
    %97 = vmatprep.subr.mxu0 0.0
    %98 = vmatpush1.msra.mxu0 0.0
    %99 = vmatprep.subr.mxu0 0.0
    %100 = vmatpush1.msra.mxu0 0.0
    %101 = vmatprep.subr.mxu0 0.0
    %102 = vmatpush1.msra.mxu0 0.0
    %103 = vmatprep.subr.mxu0 0.0
    %104 = vmatpush1.msra.mxu0 0.0
    %105 = vmatprep.subr.mxu0 0.0
    %106 = vmatpush1.msra.mxu0 0.0
    %107 = vmatprep.subr.mxu0 0.0
    %108 = vmatpush1.msra.mxu0 0.0
    %109 = vmatprep.subr.mxu0 0.0
    %110 = vmatpush1.msra.mxu0 0.0
    %111 = vmatprep.subr.mxu0 0.0
    %112 = vmatpush1.msra.mxu0 0.0
    %113 = vmatprep.subr.mxu0 0.0
    %114 = vmatpush1.msra.mxu0 0.0
    %115 = vmatprep.subr.mxu0 0.0
    %116 = vmatpush1.msra.mxu0 0.0
    %117 = vmatprep.subr.mxu0 0.0
    %118 = vmatpush1.msra.mxu0 0.0
    %119 = vmatprep.subr.mxu0 0.0
    %120 = vmatpush1.msra.mxu0 0.0
    %121 = vmatprep.subr.mxu0 0.0
    %122 = vmatpush1.msra.mxu0 0.0
    %123 = vmatprep.subr.mxu0 0.0
    %124 = vmatpush1.msra.mxu0 0.0
    %125 = vmatprep.subr.mxu0 0.0
    %126 = vmatpush1.msra.mxu0 0.0
    %127 = vmatprep.subr.mxu0 0.0
    %128 = vmatpush1.msra.mxu0 0.0
    %129 = vmatprep.subr.mxu0 0.0
    %130 = vmatpush1.msra.mxu0 0.0
    %131 = vmatprep.subr.mxu0 0.0
    %132 = vmatpush1.msra.mxu0 0.0
    %133 = vmatprep.subr.mxu0 0.0
    %134 = vmatpush1.msra.mxu0 0.0
    %135 = vmatprep.subr.mxu0 0.0
    %136 = vmatpush1.msra.mxu0 0.0
    %137 = vmatprep.subr.mxu0 0.0
    %138 = vmatpush1.msra.mxu0 0.0
    %139 = vmatprep.mubr.f32.mxu0 0.0
    %140 = vmatmul.mubr.f32.gmra.mrb[0].mxu0 %v66
    %v141 = vpop.f32.mrb[0].mxu0
    %v142 = vadd.f32 0.0, %v141
    %v143 = vpop.f32.mrb[0].mxu0
    %v144 = vadd.f32 0.0, %v143
    %145 = vdwg.mxu0
    %v147 = vlaneseq
    %v148 = vshrl.u32 %v147, 7
    %v149 = vsub.s32 0, %v148
    %v150 = vrot.slane %v35, %v149
    %v151 = vlaneseq
    %v152 = vshrl.u32 %v151, 7
    %v153 = vsub.s32 1, %v152
    %v154 = vrot.slane %v35, %v153
    %v157 = vmul.f32 %v142, %v150
    %v158 = vmul.f32 %v144, %v154
    %v160 = vsel %vm64, %v19, 0
    %v162 = vsel %vm68, %v51, 0
    %v164 = vsel %vm68, %v53, 0
    %166 = vmatprep.subr.mxu0 %v164
    %167 = vmatpush1.msra.mxu0 %v162
    %168 = vmatprep.subr.mxu0 0.0
    %169 = vmatpush1.msra.mxu0 0.0
    %170 = vmatprep.subr.mxu0 0.0
    %171 = vmatpush1.msra.mxu0 0.0
    %172 = vmatprep.subr.mxu0 0.0
    %173 = vmatpush1.msra.mxu0 0.0
    %174 = vmatprep.subr.mxu0 0.0
    %175 = vmatpush1.msra.mxu0 0.0
    %176 = vmatprep.subr.mxu0 0.0
    %177 = vmatpush1.msra.mxu0 0.0
    %178 = vmatprep.subr.mxu0 0.0
    %179 = vmatpush1.msra.mxu0 0.0
    %180 = vmatprep.subr.mxu0 0.0
    %181 = vmatpush1.msra.mxu0 0.0
    %182 = vmatprep.subr.mxu0 0.0
    %183 = vmatpush1.msra.mxu0 0.0
    %184 = vmatprep.subr.mxu0 0.0
    %185 = vmatpush1.msra.mxu0 0.0
    %186 = vmatprep.subr.mxu0 0.0
    %187 = vmatpush1.msra.mxu0 0.0
    %188 = vmatprep.subr.mxu0 0.0
    %189 = vmatpush1.msra.mxu0 0.0
    %190 = vmatprep.subr.mxu0 0.0
    %191 = vmatpush1.msra.mxu0 0.0
    %192 = vmatprep.subr.mxu0 0.0
    %193 = vmatpush1.msra.mxu0 0.0
    %194 = vmatprep.subr.mxu0 0.0
    %195 = vmatpush1.msra.mxu0 0.0
    %196 = vmatprep.subr.mxu0 0.0
    %197 = vmatpush1.msra.mxu0 0.0
    %198 = vmatprep.subr.mxu0 0.0
    %199 = vmatpush1.msra.mxu0 0.0
    %200 = vmatprep.subr.mxu0 0.0
    %201 = vmatpush1.msra.mxu0 0.0
    %202 = vmatprep.subr.mxu0 0.0
    %203 = vmatpush1.msra.mxu0 0.0
    %204 = vmatprep.subr.mxu0 0.0
    %205 = vmatpush1.msra.mxu0 0.0
    %206 = vmatprep.subr.mxu0 0.0
    %207 = vmatpush1.msra.mxu0 0.0
    %208 = vmatprep.subr.mxu0 0.0
    %209 = vmatpush1.msra.mxu0 0.0
    %210 = vmatprep.subr.mxu0 0.0
    %211 = vmatpush1.msra.mxu0 0.0
    %212 = vmatprep.subr.mxu0 0.0
    %213 = vmatpush1.msra.mxu0 0.0
    %214 = vmatprep.subr.mxu0 0.0
    %215 = vmatpush1.msra.mxu0 0.0
    %216 = vmatprep.subr.mxu0 0.0
    %217 = vmatpush1.msra.mxu0 0.0
    %218 = vmatprep.subr.mxu0 0.0
    %219 = vmatpush1.msra.mxu0 0.0
    %220 = vmatprep.subr.mxu0 0.0
    %221 = vmatpush1.msra.mxu0 0.0
    %222 = vmatprep.subr.mxu0 0.0
    %223 = vmatpush1.msra.mxu0 0.0
    %224 = vmatprep.subr.mxu0 0.0
    %225 = vmatpush1.msra.mxu0 0.0
    %226 = vmatprep.subr.mxu0 0.0
    %227 = vmatpush1.msra.mxu0 0.0
    %228 = vmatprep.subr.mxu0 0.0
    %229 = vmatpush1.msra.mxu0 0.0
    %230 = vmatprep.mubr.f32.mxu0 0.0
    %231 = vmatmul.mubr.f32.gmra.mrb[0].mxu0 %v160
    %v232 = vpop.f32.mrb[0].mxu0
    %v233 = vadd.f32 %v157, %v232
    %v234 = vpop.f32.mrb[0].mxu0
    %v235 = vadd.f32 %v158, %v234
    %236 = vdwg.mxu0
    %237 = vrot.lane.b32.xlu0 %v51, 16
    %v238 = vpop.permute.xlu0 %237
    %239 = vrot.lane.b32.xlu0 %v53, 16
    %v240 = vpop.permute.xlu0 %239
    %vm241 = vcmp.lt.s32.totalorder %v60, 16
    %v242 = vsel %vm241, %v238, %v240
    %v243 = vsel %vm241, %v240, %v238
    %v245 = vsel %vm64, %v22, 0
    %v248 = vsel %vm68, %v243, 0
    %v251 = vsel %vm68, %v242, 0
    %253 = vmatprep.subr.mxu0 %v251
    %254 = vmatpush1.msra.mxu0 %v248
    %255 = vmatprep.subr.mxu0 0.0
    %256 = vmatpush1.msra.mxu0 0.0
    %257 = vmatprep.subr.mxu0 0.0
    %258 = vmatpush1.msra.mxu0 0.0
    %259 = vmatprep.subr.mxu0 0.0
    %260 = vmatpush1.msra.mxu0 0.0
    %261 = vmatprep.subr.mxu0 0.0
    %262 = vmatpush1.msra.mxu0 0.0
    %263 = vmatprep.subr.mxu0 0.0
    %264 = vmatpush1.msra.mxu0 0.0
    %265 = vmatprep.subr.mxu0 0.0
    %266 = vmatpush1.msra.mxu0 0.0
    %267 = vmatprep.subr.mxu0 0.0
    %268 = vmatpush1.msra.mxu0 0.0
    %269 = vmatprep.subr.mxu0 0.0
    %270 = vmatpush1.msra.mxu0 0.0
    %271 = vmatprep.subr.mxu0 0.0
    %272 = vmatpush1.msra.mxu0 0.0
    %273 = vmatprep.subr.mxu0 0.0
    %274 = vmatpush1.msra.mxu0 0.0
    %275 = vmatprep.subr.mxu0 0.0
    %276 = vmatpush1.msra.mxu0 0.0
    %277 = vmatprep.subr.mxu0 0.0
    %278 = vmatpush1.msra.mxu0 0.0
    %279 = vmatprep.subr.mxu0 0.0
    %280 = vmatpush1.msra.mxu0 0.0
    %281 = vmatprep.subr.mxu0 0.0
    %282 = vmatpush1.msra.mxu0 0.0
    %283 = vmatprep.subr.mxu0 0.0
    %284 = vmatpush1.msra.mxu0 0.0
    %285 = vmatprep.subr.mxu0 0.0
    %286 = vmatpush1.msra.mxu0 0.0
    %287 = vmatprep.subr.mxu0 0.0
    %288 = vmatpush1.msra.mxu0 0.0
    %289 = vmatprep.subr.mxu0 0.0
    %290 = vmatpush1.msra.mxu0 0.0
    %291 = vmatprep.subr.mxu0 0.0
    %292 = vmatpush1.msra.mxu0 0.0
    %293 = vmatprep.subr.mxu0 0.0
    %294 = vmatpush1.msra.mxu0 0.0
    %295 = vmatprep.subr.mxu0 0.0
    %296 = vmatpush1.msra.mxu0 0.0
    %297 = vmatprep.subr.mxu0 0.0
    %298 = vmatpush1.msra.mxu0 0.0
    %299 = vmatprep.subr.mxu0 0.0
    %300 = vmatpush1.msra.mxu0 0.0
    %301 = vmatprep.subr.mxu0 0.0
    %302 = vmatpush1.msra.mxu0 0.0
    %303 = vmatprep.subr.mxu0 0.0
    %304 = vmatpush1.msra.mxu0 0.0
    %305 = vmatprep.subr.mxu0 0.0
    %306 = vmatpush1.msra.mxu0 0.0
    %307 = vmatprep.subr.mxu0 0.0
    %308 = vmatpush1.msra.mxu0 0.0
    %309 = vmatprep.subr.mxu0 0.0
    %310 = vmatpush1.msra.mxu0 0.0
    %311 = vmatprep.subr.mxu0 0.0
    %312 = vmatpush1.msra.mxu0 0.0
    %313 = vmatprep.subr.mxu0 0.0
    %314 = vmatpush1.msra.mxu0 0.0
    %315 = vmatprep.subr.mxu0 0.0
    %316 = vmatpush1.msra.mxu0 0.0
    %317 = vmatprep.mubr.f32.mxu0 0.0
    %318 = vmatmul.mubr.f32.gmra.mrb[0].mxu0 %v245
    %v319 = vpop.f32.mrb[0].mxu0
    %v320 = vadd.f32 0.0, %v319
    %v321 = vpop.f32.mrb[0].mxu0
    %v322 = vadd.f32 0.0, %v321
    %323 = vdwg.mxu0
    %v325 = vlaneseq
    %v326 = vshrl.u32 %v325, 7
    %v327 = vsub.s32 0, %v326
    %v328 = vrot.slane %v37, %v327
    %v329 = vlaneseq
    %v330 = vshrl.u32 %v329, 7
    %v331 = vsub.s32 1, %v330
    %v332 = vrot.slane %v37, %v331
    %v335 = vmul.f32 %v320, %v328
    %v336 = vmul.f32 %v322, %v332
    %v337 = vadd.f32 %v233, %v335
    %v338 = vadd.f32 %v235, %v336
    %339 = vrot.lane.b32.xlu0 %v51, 15
    %v340 = vpop.permute.xlu0 %339
    %341 = vrot.lane.b32.xlu0 %v53, 15
    %v342 = vpop.permute.xlu0 %341
    %vm343 = vcmp.lt.s32.totalorder %v60, 15
    %v344 = vsel %vm343, %v340, %v342
    %v345 = vsel %vm343, %v342, %v340
    %v347 = vsel %vm64, %v24, 0
    %v350 = vsel %vm68, %v345, 0
    %v353 = vsel %vm68, %v344, 0
    %355 = vmatprep.subr.mxu0 %v353
    %356 = vmatpush1.msra.mxu0 %v350
    %357 = vmatprep.subr.mxu0 0.0
    %358 = vmatpush1.msra.mxu0 0.0
    %359 = vmatprep.subr.mxu0 0.0
    %360 = vmatpush1.msra.mxu0 0.0
    %361 = vmatprep.subr.mxu0 0.0
    %362 = vmatpush1.msra.mxu0 0.0
    %363 = vmatprep.subr.mxu0 0.0
    %364 = vmatpush1.msra.mxu0 0.0
    %365 = vmatprep.subr.mxu0 0.0
    %366 = vmatpush1.msra.mxu0 0.0
    %367 = vmatprep.subr.mxu0 0.0
    %368 = vmatpush1.msra.mxu0 0.0
    %369 = vmatprep.subr.mxu0 0.0
    %370 = vmatpush1.msra.mxu0 0.0
    %371 = vmatprep.subr.mxu0 0.0
    %372 = vmatpush1.msra.mxu0 0.0
    %373 = vmatprep.subr.mxu0 0.0
    %374 = vmatpush1.msra.mxu0 0.0
    %375 = vmatprep.subr.mxu0 0.0
    %376 = vmatpush1.msra.mxu0 0.0
    %377 = vmatprep.subr.mxu0 0.0
    %378 = vmatpush1.msra.mxu0 0.0
    %379 = vmatprep.subr.mxu0 0.0
    %380 = vmatpush1.msra.mxu0 0.0
    %381 = vmatprep.subr.mxu0 0.0
    %382 = vmatpush1.msra.mxu0 0.0
    %383 = vmatprep.subr.mxu0 0.0
    %384 = vmatpush1.msra.mxu0 0.0
    %385 = vmatprep.subr.mxu0 0.0
    %386 = vmatpush1.msra.mxu0 0.0
    %387 = vmatprep.subr.mxu0 0.0
    %388 = vmatpush1.msra.mxu0 0.0
    %389 = vmatprep.subr.mxu0 0.0
    %390 = vmatpush1.msra.mxu0 0.0
    %391 = vmatprep.subr.mxu0 0.0
    %392 = vmatpush1.msra.mxu0 0.0
    %393 = vmatprep.subr.mxu0 0.0
    %394 = vmatpush1.msra.mxu0 0.0
    %395 = vmatprep.subr.mxu0 0.0
    %396 = vmatpush1.msra.mxu0 0.0
    %397 = vmatprep.subr.mxu0 0.0
    %398 = vmatpush1.msra.mxu0 0.0
    %399 = vmatprep.subr.mxu0 0.0
    %400 = vmatpush1.msra.mxu0 0.0
    %401 = vmatprep.subr.mxu0 0.0
    %402 = vmatpush1.msra.mxu0 0.0
    %403 = vmatprep.subr.mxu0 0.0
    %404 = vmatpush1.msra.mxu0 0.0
    %405 = vmatprep.subr.mxu0 0.0
    %406 = vmatpush1.msra.mxu0 0.0
    %407 = vmatprep.subr.mxu0 0.0
    %408 = vmatpush1.msra.mxu0 0.0
    %409 = vmatprep.subr.mxu0 0.0
    %410 = vmatpush1.msra.mxu0 0.0
    %411 = vmatprep.subr.mxu0 0.0
    %412 = vmatpush1.msra.mxu0 0.0
    %413 = vmatprep.subr.mxu0 0.0
    %414 = vmatpush1.msra.mxu0 0.0
    %415 = vmatprep.subr.mxu0 0.0
    %416 = vmatpush1.msra.mxu0 0.0
    %417 = vmatprep.subr.mxu0 0.0
    %418 = vmatpush1.msra.mxu0 0.0
    %419 = vmatprep.mubr.f32.mxu0 0.0
    %420 = vmatmul.mubr.f32.gmra.mrb[0].mxu0 %v347
    %v421 = vpop.f32.mrb[0].mxu0
    %v422 = vadd.f32 0.0, %v421
    %v423 = vpop.f32.mrb[0].mxu0
    %v424 = vadd.f32 0.0, %v423
    %425 = vdwg.mxu0
    %v427 = vlaneseq
    %v428 = vshrl.u32 %v427, 7
    %v429 = vsub.s32 0, %v428
    %v430 = vrot.slane %v39, %v429
    %v431 = vlaneseq
    %v432 = vshrl.u32 %v431, 7
    %v433 = vsub.s32 1, %v432
    %v434 = vrot.slane %v39, %v433
    %v437 = vmul.f32 %v422, %v430
    %v438 = vmul.f32 %v424, %v434
    %v439 = vadd.f32 %v337, %v437
    %v440 = vadd.f32 %v338, %v438
    %441 = vrot.lane.b32.xlu0 %v51, 1
    %v442 = vpop.permute.xlu0 %441
    %443 = vrot.lane.b32.xlu0 %v53, 1
    %v444 = vpop.permute.xlu0 %443
    %vm445 = vcmp.lt.s32.totalorder %v60, 1
    %v446 = vsel %vm445, %v442, %v444
    %v447 = vsel %vm445, %v444, %v442
    %v449 = vsel %vm64, %v26, 0
    %v452 = vsel %vm68, %v447, 0
    %v455 = vsel %vm68, %v446, 0
    %457 = vmatprep.subr.mxu0 %v455
    %458 = vmatpush1.msra.mxu0 %v452
    %459 = vmatprep.subr.mxu0 0.0
    %460 = vmatpush1.msra.mxu0 0.0
    %461 = vmatprep.subr.mxu0 0.0
    %462 = vmatpush1.msra.mxu0 0.0
    %463 = vmatprep.subr.mxu0 0.0
    %464 = vmatpush1.msra.mxu0 0.0
    %465 = vmatprep.subr.mxu0 0.0
    %466 = vmatpush1.msra.mxu0 0.0
    %467 = vmatprep.subr.mxu0 0.0
    %468 = vmatpush1.msra.mxu0 0.0
    %469 = vmatprep.subr.mxu0 0.0
    %470 = vmatpush1.msra.mxu0 0.0
    %471 = vmatprep.subr.mxu0 0.0
    %472 = vmatpush1.msra.mxu0 0.0
    %473 = vmatprep.subr.mxu0 0.0
    %474 = vmatpush1.msra.mxu0 0.0
    %475 = vmatprep.subr.mxu0 0.0
    %476 = vmatpush1.msra.mxu0 0.0
    %477 = vmatprep.subr.mxu0 0.0
    %478 = vmatpush1.msra.mxu0 0.0
    %479 = vmatprep.subr.mxu0 0.0
    %480 = vmatpush1.msra.mxu0 0.0
    %481 = vmatprep.subr.mxu0 0.0
    %482 = vmatpush1.msra.mxu0 0.0
    %483 = vmatprep.subr.mxu0 0.0
    %484 = vmatpush1.msra.mxu0 0.0
    %485 = vmatprep.subr.mxu0 0.0
    %486 = vmatpush1.msra.mxu0 0.0
    %487 = vmatprep.subr.mxu0 0.0
    %488 = vmatpush1.msra.mxu0 0.0
    %489 = vmatprep.subr.mxu0 0.0
    %490 = vmatpush1.msra.mxu0 0.0
    %491 = vmatprep.subr.mxu0 0.0
    %492 = vmatpush1.msra.mxu0 0.0
    %493 = vmatprep.subr.mxu0 0.0
    %494 = vmatpush1.msra.mxu0 0.0
    %495 = vmatprep.subr.mxu0 0.0
    %496 = vmatpush1.msra.mxu0 0.0
    %497 = vmatprep.subr.mxu0 0.0
    %498 = vmatpush1.msra.mxu0 0.0
    %499 = vmatprep.subr.mxu0 0.0
    %500 = vmatpush1.msra.mxu0 0.0
    %501 = vmatprep.subr.mxu0 0.0
    %502 = vmatpush1.msra.mxu0 0.0
    %503 = vmatprep.subr.mxu0 0.0
    %504 = vmatpush1.msra.mxu0 0.0
    %505 = vmatprep.subr.mxu0 0.0
    %506 = vmatpush1.msra.mxu0 0.0
    %507 = vmatprep.subr.mxu0 0.0
    %508 = vmatpush1.msra.mxu0 0.0
    %509 = vmatprep.subr.mxu0 0.0
    %510 = vmatpush1.msra.mxu0 0.0
    %511 = vmatprep.subr.mxu0 0.0
    %512 = vmatpush1.msra.mxu0 0.0
    %513 = vmatprep.subr.mxu0 0.0
    %514 = vmatpush1.msra.mxu0 0.0
    %515 = vmatprep.subr.mxu0 0.0
    %516 = vmatpush1.msra.mxu0 0.0
    %517 = vmatprep.subr.mxu0 0.0
    %518 = vmatpush1.msra.mxu0 0.0
    %519 = vmatprep.subr.mxu0 0.0
    %520 = vmatpush1.msra.mxu0 0.0
    %521 = vmatprep.mubr.f32.mxu0 0.0
    %522 = vmatmul.mubr.f32.gmra.mrb[0].mxu0 %v449
    %v523 = vpop.f32.mrb[0].mxu0
    %v524 = vadd.f32 0.0, %v523
    %v525 = vpop.f32.mrb[0].mxu0
    %v526 = vadd.f32 0.0, %v525
    %527 = vdwg.mxu0
    %v529 = vlaneseq
    %v530 = vshrl.u32 %v529, 7
    %v531 = vsub.s32 0, %v530
    %v532 = vrot.slane %v41, %v531
    %v533 = vlaneseq
    %v534 = vshrl.u32 %v533, 7
    %v535 = vsub.s32 1, %v534
    %v536 = vrot.slane %v41, %v535
    %v539 = vmul.f32 %v524, %v532
    %v540 = vmul.f32 %v526, %v536
    %v541 = vadd.f32 %v439, %v539
    %v542 = vadd.f32 %v440, %v540
    %543 = vrot.lane.b32.xlu0 %v51, 127
    %v544 = vpop.permute.xlu0 %543
    %545 = vrot.lane.b32.xlu0 %v53, 127
    %v546 = vpop.permute.xlu0 %545
    %vm547 = vcmp.lt.s32.totalorder %v60, 127
    %v548 = vsel %vm547, %v544, %v546
    %v549 = vsel %vm547, %v546, %v544
    %v551 = vsel %vm64, %v28, 0
    %v554 = vsel %vm68, %v548, 0
    %v557 = vsel %vm68, %v549, 0
    %559 = vmatprep.subr.mxu0 %v557
    %560 = vmatpush1.msra.mxu0 %v554
    %561 = vmatprep.subr.mxu0 0.0
    %562 = vmatpush1.msra.mxu0 0.0
    %563 = vmatprep.subr.mxu0 0.0
    %564 = vmatpush1.msra.mxu0 0.0
    %565 = vmatprep.subr.mxu0 0.0
    %566 = vmatpush1.msra.mxu0 0.0
    %567 = vmatprep.subr.mxu0 0.0
    %568 = vmatpush1.msra.mxu0 0.0
    %569 = vmatprep.subr.mxu0 0.0
    %570 = vmatpush1.msra.mxu0 0.0
    %571 = vmatprep.subr.mxu0 0.0
    %572 = vmatpush1.msra.mxu0 0.0
    %573 = vmatprep.subr.mxu0 0.0
    %574 = vmatpush1.msra.mxu0 0.0
    %575 = vmatprep.subr.mxu0 0.0
    %576 = vmatpush1.msra.mxu0 0.0
    %577 = vmatprep.subr.mxu0 0.0
    %578 = vmatpush1.msra.mxu0 0.0
    %579 = vmatprep.subr.mxu0 0.0
    %580 = vmatpush1.msra.mxu0 0.0
    %581 = vmatprep.subr.mxu0 0.0
    %582 = vmatpush1.msra.mxu0 0.0
    %583 = vmatprep.subr.mxu0 0.0
    %584 = vmatpush1.msra.mxu0 0.0
    %585 = vmatprep.subr.mxu0 0.0
    %586 = vmatpush1.msra.mxu0 0.0
    %587 = vmatprep.subr.mxu0 0.0
    %588 = vmatpush1.msra.mxu0 0.0
    %589 = vmatprep.subr.mxu0 0.0
    %590 = vmatpush1.msra.mxu0 0.0
    %591 = vmatprep.subr.mxu0 0.0
    %592 = vmatpush1.msra.mxu0 0.0
    %593 = vmatprep.subr.mxu0 0.0
    %594 = vmatpush1.msra.mxu0 0.0
    %595 = vmatprep.subr.mxu0 0.0
    %596 = vmatpush1.msra.mxu0 0.0
    %597 = vmatprep.subr.mxu0 0.0
    %598 = vmatpush1.msra.mxu0 0.0
    %599 = vmatprep.subr.mxu0 0.0
    %600 = vmatpush1.msra.mxu0 0.0
    %601 = vmatprep.subr.mxu0 0.0
    %602 = vmatpush1.msra.mxu0 0.0
    %603 = vmatprep.subr.mxu0 0.0
    %604 = vmatpush1.msra.mxu0 0.0
    %605 = vmatprep.subr.mxu0 0.0
    %606 = vmatpush1.msra.mxu0 0.0
    %607 = vmatprep.subr.mxu0 0.0
    %608 = vmatpush1.msra.mxu0 0.0
    %609 = vmatprep.subr.mxu0 0.0
    %610 = vmatpush1.msra.mxu0 0.0
    %611 = vmatprep.subr.mxu0 0.0
    %612 = vmatpush1.msra.mxu0 0.0
    %613 = vmatprep.subr.mxu0 0.0
    %614 = vmatpush1.msra.mxu0 0.0
    %615 = vmatprep.subr.mxu0 0.0
    %616 = vmatpush1.msra.mxu0 0.0
    %617 = vmatprep.subr.mxu0 0.0
    %618 = vmatpush1.msra.mxu0 0.0
    %619 = vmatprep.subr.mxu0 0.0
    %620 = vmatpush1.msra.mxu0 0.0
    %621 = vmatprep.subr.mxu0 0.0
    %622 = vmatpush1.msra.mxu0 0.0
    %623 = vmatprep.mubr.f32.mxu0 0.0
    %624 = vmatmul.mubr.f32.gmra.mrb[0].mxu0 %v551
    %v625 = vpop.f32.mrb[0].mxu0
    %v626 = vadd.f32 0.0, %v625
    %v627 = vpop.f32.mrb[0].mxu0
    %v628 = vadd.f32 0.0, %v627
    %629 = vdwg.mxu0
    %v631 = vlaneseq
    %v632 = vshrl.u32 %v631, 7
    %v633 = vsub.s32 0, %v632
    %v634 = vrot.slane %v43, %v633
    %v635 = vlaneseq
    %v636 = vshrl.u32 %v635, 7
    %v637 = vsub.s32 1, %v636
    %v638 = vrot.slane %v43, %v637
    %v641 = vmul.f32 %v626, %v634
    %v642 = vmul.f32 %v628, %v638
    %v643 = vadd.f32 %v541, %v641
    %v644 = vadd.f32 %v542, %v642
    %645 = vrot.lane.b32.xlu0 %v51, 113
    %v646 = vpop.permute.xlu0 %645
    %647 = vrot.lane.b32.xlu0 %v53, 113
    %v648 = vpop.permute.xlu0 %647
    %vm649 = vcmp.lt.s32.totalorder %v60, 113
    %v650 = vsel %vm649, %v646, %v648
    %v651 = vsel %vm649, %v648, %v646
    %v653 = vsel %vm64, %v30, 0
    %v656 = vsel %vm68, %v650, 0
    %v659 = vsel %vm68, %v651, 0
    %661 = vmatprep.subr.mxu0 %v659
    %662 = vmatpush1.msra.mxu0 %v656
    %663 = vmatprep.subr.mxu0 0.0
    %664 = vmatpush1.msra.mxu0 0.0
    %665 = vmatprep.subr.mxu0 0.0
    %666 = vmatpush1.msra.mxu0 0.0
    %667 = vmatprep.subr.mxu0 0.0
    %668 = vmatpush1.msra.mxu0 0.0
    %669 = vmatprep.subr.mxu0 0.0
    %670 = vmatpush1.msra.mxu0 0.0
    %671 = vmatprep.subr.mxu0 0.0
    %672 = vmatpush1.msra.mxu0 0.0
    %673 = vmatprep.subr.mxu0 0.0
    %674 = vmatpush1.msra.mxu0 0.0
    %675 = vmatprep.subr.mxu0 0.0
    %676 = vmatpush1.msra.mxu0 0.0
    %677 = vmatprep.subr.mxu0 0.0
    %678 = vmatpush1.msra.mxu0 0.0
    %679 = vmatprep.subr.mxu0 0.0
    %680 = vmatpush1.msra.mxu0 0.0
    %681 = vmatprep.subr.mxu0 0.0
    %682 = vmatpush1.msra.mxu0 0.0
    %683 = vmatprep.subr.mxu0 0.0
    %684 = vmatpush1.msra.mxu0 0.0
    %685 = vmatprep.subr.mxu0 0.0
    %686 = vmatpush1.msra.mxu0 0.0
    %687 = vmatprep.subr.mxu0 0.0
    %688 = vmatpush1.msra.mxu0 0.0
    %689 = vmatprep.subr.mxu0 0.0
    %690 = vmatpush1.msra.mxu0 0.0
    %691 = vmatprep.subr.mxu0 0.0
    %692 = vmatpush1.msra.mxu0 0.0
    %693 = vmatprep.subr.mxu0 0.0
    %694 = vmatpush1.msra.mxu0 0.0
    %695 = vmatprep.subr.mxu0 0.0
    %696 = vmatpush1.msra.mxu0 0.0
    %697 = vmatprep.subr.mxu0 0.0
    %698 = vmatpush1.msra.mxu0 0.0
    %699 = vmatprep.subr.mxu0 0.0
    %700 = vmatpush1.msra.mxu0 0.0
    %701 = vmatprep.subr.mxu0 0.0
    %702 = vmatpush1.msra.mxu0 0.0
    %703 = vmatprep.subr.mxu0 0.0
    %704 = vmatpush1.msra.mxu0 0.0
    %705 = vmatprep.subr.mxu0 0.0
    %706 = vmatpush1.msra.mxu0 0.0
    %707 = vmatprep.subr.mxu0 0.0
    %708 = vmatpush1.msra.mxu0 0.0
    %709 = vmatprep.subr.mxu0 0.0
    %710 = vmatpush1.msra.mxu0 0.0
    %711 = vmatprep.subr.mxu0 0.0
    %712 = vmatpush1.msra.mxu0 0.0
    %713 = vmatprep.subr.mxu0 0.0
    %714 = vmatpush1.msra.mxu0 0.0
    %715 = vmatprep.subr.mxu0 0.0
    %716 = vmatpush1.msra.mxu0 0.0
    %717 = vmatprep.subr.mxu0 0.0
    %718 = vmatpush1.msra.mxu0 0.0
    %719 = vmatprep.subr.mxu0 0.0
    %720 = vmatpush1.msra.mxu0 0.0
    %721 = vmatprep.subr.mxu0 0.0
    %722 = vmatpush1.msra.mxu0 0.0
    %723 = vmatprep.subr.mxu0 0.0
    %724 = vmatpush1.msra.mxu0 0.0
    %725 = vmatprep.mubr.f32.mxu0 0.0
    %726 = vmatmul.mubr.f32.gmra.mrb[0].mxu0 %v653
    %v727 = vpop.f32.mrb[0].mxu0
    %v728 = vadd.f32 0.0, %v727
    %v729 = vpop.f32.mrb[0].mxu0
    %v730 = vadd.f32 0.0, %v729
    %731 = vdwg.mxu0
    %v733 = vlaneseq
    %v734 = vshrl.u32 %v733, 7
    %v735 = vsub.s32 0, %v734
    %v736 = vrot.slane %v45, %v735
    %v737 = vlaneseq
    %v738 = vshrl.u32 %v737, 7
    %v739 = vsub.s32 1, %v738
    %v740 = vrot.slane %v45, %v739
    %v743 = vmul.f32 %v728, %v736
    %v744 = vmul.f32 %v730, %v740
    %v745 = vadd.f32 %v643, %v743
    %v746 = vadd.f32 %v644, %v744
    %747 = vrot.lane.b32.xlu0 %v51, 112
    %v748 = vpop.permute.xlu0 %747
    %749 = vrot.lane.b32.xlu0 %v53, 112
    %v750 = vpop.permute.xlu0 %749
    %vm751 = vcmp.lt.s32.totalorder %v60, 112
    %v752 = vsel %vm751, %v748, %v750
    %v753 = vsel %vm751, %v750, %v748
    %v755 = vsel %vm64, %v32, 0
    %v758 = vsel %vm68, %v752, 0
    %v761 = vsel %vm68, %v753, 0
    %763 = vmatprep.subr.mxu0 %v761
    %764 = vmatpush1.msra.mxu0 %v758
    %765 = vmatprep.subr.mxu0 0.0
    %766 = vmatpush1.msra.mxu0 0.0
    %767 = vmatprep.subr.mxu0 0.0
    %768 = vmatpush1.msra.mxu0 0.0
    %769 = vmatprep.subr.mxu0 0.0
    %770 = vmatpush1.msra.mxu0 0.0
    %771 = vmatprep.subr.mxu0 0.0
    %772 = vmatpush1.msra.mxu0 0.0
    %773 = vmatprep.subr.mxu0 0.0
    %774 = vmatpush1.msra.mxu0 0.0
    %775 = vmatprep.subr.mxu0 0.0
    %776 = vmatpush1.msra.mxu0 0.0
    %777 = vmatprep.subr.mxu0 0.0
    %778 = vmatpush1.msra.mxu0 0.0
    %779 = vmatprep.subr.mxu0 0.0
    %780 = vmatpush1.msra.mxu0 0.0
    %781 = vmatprep.subr.mxu0 0.0
    %782 = vmatpush1.msra.mxu0 0.0
    %783 = vmatprep.subr.mxu0 0.0
    %784 = vmatpush1.msra.mxu0 0.0
    %785 = vmatprep.subr.mxu0 0.0
    %786 = vmatpush1.msra.mxu0 0.0
    %787 = vmatprep.subr.mxu0 0.0
    %788 = vmatpush1.msra.mxu0 0.0
    %789 = vmatprep.subr.mxu0 0.0
    %790 = vmatpush1.msra.mxu0 0.0
    %791 = vmatprep.subr.mxu0 0.0
    %792 = vmatpush1.msra.mxu0 0.0
    %793 = vmatprep.subr.mxu0 0.0
    %794 = vmatpush1.msra.mxu0 0.0
    %795 = vmatprep.subr.mxu0 0.0
    %796 = vmatpush1.msra.mxu0 0.0
    %797 = vmatprep.subr.mxu0 0.0
    %798 = vmatpush1.msra.mxu0 0.0
    %799 = vmatprep.subr.mxu0 0.0
    %800 = vmatpush1.msra.mxu0 0.0
    %801 = vmatprep.subr.mxu0 0.0
    %802 = vmatpush1.msra.mxu0 0.0
    %803 = vmatprep.subr.mxu0 0.0
    %804 = vmatpush1.msra.mxu0 0.0
    %805 = vmatprep.subr.mxu0 0.0
    %806 = vmatpush1.msra.mxu0 0.0
    %807 = vmatprep.subr.mxu0 0.0
    %808 = vmatpush1.msra.mxu0 0.0
    %809 = vmatprep.subr.mxu0 0.0
    %810 = vmatpush1.msra.mxu0 0.0
    %811 = vmatprep.subr.mxu0 0.0
    %812 = vmatpush1.msra.mxu0 0.0
    %813 = vmatprep.subr.mxu0 0.0
    %814 = vmatpush1.msra.mxu0 0.0
    %815 = vmatprep.subr.mxu0 0.0
    %816 = vmatpush1.msra.mxu0 0.0
    %817 = vmatprep.subr.mxu0 0.0
    %818 = vmatpush1.msra.mxu0 0.0
    %819 = vmatprep.subr.mxu0 0.0
    %820 = vmatpush1.msra.mxu0 0.0
    %821 = vmatprep.subr.mxu0 0.0
    %822 = vmatpush1.msra.mxu0 0.0
    %823 = vmatprep.subr.mxu0 0.0
    %824 = vmatpush1.msra.mxu0 0.0
    %825 = vmatprep.subr.mxu0 0.0
    %826 = vmatpush1.msra.mxu0 0.0
    %827 = vmatprep.mubr.f32.mxu0 0.0
    %828 = vmatmul.mubr.f32.gmra.mrb[0].mxu0 %v755
    %v829 = vpop.f32.mrb[0].mxu0
    %v830 = vadd.f32 0.0, %v829
    %v831 = vpop.f32.mrb[0].mxu0
    %v832 = vadd.f32 0.0, %v831
    %833 = vdwg.mxu0
    %v835 = vlaneseq
    %v836 = vshrl.u32 %v835, 7
    %v837 = vsub.s32 0, %v836
    %v838 = vrot.slane %v47, %v837
    %v839 = vlaneseq
    %v840 = vshrl.u32 %v839, 7
    %v841 = vsub.s32 1, %v840
    %v842 = vrot.slane %v47, %v841
    %v845 = vmul.f32 %v830, %v838
    %v846 = vmul.f32 %v832, %v842
    %v847 = vadd.f32 %v745, %v845
    %v848 = vadd.f32 %v746, %v846
    %849 = vrot.lane.b32.xlu0 %v51, 111
    %v850 = vpop.permute.xlu0 %849
    %851 = vrot.lane.b32.xlu0 %v53, 111
    %v852 = vpop.permute.xlu0 %851
    %vm853 = vcmp.lt.s32.totalorder %v60, 111
    %v854 = vsel %vm853, %v850, %v852
    %v855 = vsel %vm853, %v852, %v850
    %v857 = vsel %vm64, %v34, 0
    %v860 = vsel %vm68, %v854, 0
    %v863 = vsel %vm68, %v855, 0
    %865 = vmatprep.subr.mxu0 %v863
    %866 = vmatpush1.msra.mxu0 %v860
    %867 = vmatprep.subr.mxu0 0.0
    %868 = vmatpush1.msra.mxu0 0.0
    %869 = vmatprep.subr.mxu0 0.0
    %870 = vmatpush1.msra.mxu0 0.0
    %871 = vmatprep.subr.mxu0 0.0
    %872 = vmatpush1.msra.mxu0 0.0
    %873 = vmatprep.subr.mxu0 0.0
    %874 = vmatpush1.msra.mxu0 0.0
    %875 = vmatprep.subr.mxu0 0.0
    %876 = vmatpush1.msra.mxu0 0.0
    %877 = vmatprep.subr.mxu0 0.0
    %878 = vmatpush1.msra.mxu0 0.0
    %879 = vmatprep.subr.mxu0 0.0
    %880 = vmatpush1.msra.mxu0 0.0
    %881 = vmatprep.subr.mxu0 0.0
    %882 = vmatpush1.msra.mxu0 0.0
    %883 = vmatprep.subr.mxu0 0.0
    %884 = vmatpush1.msra.mxu0 0.0
    %885 = vmatprep.subr.mxu0 0.0
    %886 = vmatpush1.msra.mxu0 0.0
    %887 = vmatprep.subr.mxu0 0.0
    %888 = vmatpush1.msra.mxu0 0.0
    %889 = vmatprep.subr.mxu0 0.0
    %890 = vmatpush1.msra.mxu0 0.0
    %891 = vmatprep.subr.mxu0 0.0
    %892 = vmatpush1.msra.mxu0 0.0
    %893 = vmatprep.subr.mxu0 0.0
    %894 = vmatpush1.msra.mxu0 0.0
    %895 = vmatprep.subr.mxu0 0.0
    %896 = vmatpush1.msra.mxu0 0.0
    %897 = vmatprep.subr.mxu0 0.0
    %898 = vmatpush1.msra.mxu0 0.0
    %899 = vmatprep.subr.mxu0 0.0
    %900 = vmatpush1.msra.mxu0 0.0
    %901 = vmatprep.subr.mxu0 0.0
    %902 = vmatpush1.msra.mxu0 0.0
    %903 = vmatprep.subr.mxu0 0.0
    %904 = vmatpush1.msra.mxu0 0.0
    %905 = vmatprep.subr.mxu0 0.0
    %906 = vmatpush1.msra.mxu0 0.0
    %907 = vmatprep.subr.mxu0 0.0
    %908 = vmatpush1.msra.mxu0 0.0
    %909 = vmatprep.subr.mxu0 0.0
    %910 = vmatpush1.msra.mxu0 0.0
    %911 = vmatprep.subr.mxu0 0.0
    %912 = vmatpush1.msra.mxu0 0.0
    %913 = vmatprep.subr.mxu0 0.0
    %914 = vmatpush1.msra.mxu0 0.0
    %915 = vmatprep.subr.mxu0 0.0
    %916 = vmatpush1.msra.mxu0 0.0
    %917 = vmatprep.subr.mxu0 0.0
    %918 = vmatpush1.msra.mxu0 0.0
    %919 = vmatprep.subr.mxu0 0.0
    %920 = vmatpush1.msra.mxu0 0.0
    %921 = vmatprep.subr.mxu0 0.0
    %922 = vmatpush1.msra.mxu0 0.0
    %923 = vmatprep.subr.mxu0 0.0
    %924 = vmatpush1.msra.mxu0 0.0
    %925 = vmatprep.subr.mxu0 0.0
    %926 = vmatpush1.msra.mxu0 0.0
    %927 = vmatprep.subr.mxu0 0.0
    %928 = vmatpush1.msra.mxu0 0.0
    %929 = vmatprep.mubr.f32.mxu0 0.0
    %930 = vmatmul.mubr.f32.gmra.mrb[0].mxu0 %v857
    %v931 = vpop.f32.mrb[0].mxu0
    %v932 = vadd.f32 0.0, %v931
    %v933 = vpop.f32.mrb[0].mxu0
    %v934 = vadd.f32 0.0, %v933
    %935 = vdwg.mxu0
    %v937 = vlaneseq
    %v938 = vshrl.u32 %v937, 7
    %v939 = vsub.s32 0, %v938
    %v940 = vrot.slane %v49, %v939
    %v941 = vlaneseq
    %v942 = vshrl.u32 %v941, 7
    %v943 = vsub.s32 1, %v942
    %v944 = vrot.slane %v49, %v943
    %v947 = vmul.f32 %v932, %v940
    %v948 = vmul.f32 %v934, %v944
    %v949 = vadd.f32 %v847, %v947
    %v950 = vadd.f32 %v848, %v948
    %952 = vset.pattern.permute.xlu0 0
    %953 = vperm.xlu0 %952, %v50
    %v954 = vpop.permute.xlu0 %953
    %v956 = vadd.f32 %v949, %v954
    %v957 = vadd.f32 %v950, %v954
    %958 = vst [vmem:[#allocation2] sm:$0xff] %v956
    %959 = vst [vmem:[#allocation2 + $0x8] sm:$0xff] %v957
    %s960 = scalar_lea.vmem %s0, 8
    %v961 = vld [vmem:[%s960] sm:$0xff]
    %v963 = vcombine.high %v961, %v961
    %965 = vrot.lane.b32.xlu0 %v961, 17
    %v966 = vpop.permute.xlu0 %965
    %967 = vrot.lane.b32.xlu0 %v963, 17
    %v968 = vpop.permute.xlu0 %967
    %v969 = vsel %vm61, %v966, %v968
    %v970 = vsel %vm61, %v968, %v966
    %v972 = vsel %vm68, %v970, 0
    %v975 = vsel %vm68, %v969, 0
    %977 = vmatprep.subr.mxu0 %v975
    %978 = vmatpush1.msra.mxu0 %v972
    %979 = vmatprep.subr.mxu0 0.0
    %980 = vmatpush1.msra.mxu0 0.0
    %981 = vmatprep.subr.mxu0 0.0
    %982 = vmatpush1.msra.mxu0 0.0
    %983 = vmatprep.subr.mxu0 0.0
    %984 = vmatpush1.msra.mxu0 0.0
    %985 = vmatprep.subr.mxu0 0.0
    %986 = vmatpush1.msra.mxu0 0.0
    %987 = vmatprep.subr.mxu0 0.0
    %988 = vmatpush1.msra.mxu0 0.0
    %989 = vmatprep.subr.mxu0 0.0
    %990 = vmatpush1.msra.mxu0 0.0
    %991 = vmatprep.subr.mxu0 0.0
    %992 = vmatpush1.msra.mxu0 0.0
    %993 = vmatprep.subr.mxu0 0.0
    %994 = vmatpush1.msra.mxu0 0.0
    %995 = vmatprep.subr.mxu0 0.0
    %996 = vmatpush1.msra.mxu0 0.0
    %997 = vmatprep.subr.mxu0 0.0
    %998 = vmatpush1.msra.mxu0 0.0
    %999 = vmatprep.subr.mxu0 0.0
    %1000 = vmatpush1.msra.mxu0 0.0
    %1001 = vmatprep.subr.mxu0 0.0
    %1002 = vmatpush1.msra.mxu0 0.0
    %1003 = vmatprep.subr.mxu0 0.0
    %1004 = vmatpush1.msra.mxu0 0.0
    %1005 = vmatprep.subr.mxu0 0.0
    %1006 = vmatpush1.msra.mxu0 0.0
    %1007 = vmatprep.subr.mxu0 0.0
    %1008 = vmatpush1.msra.mxu0 0.0
    %1009 = vmatprep.subr.mxu0 0.0
    %1010 = vmatpush1.msra.mxu0 0.0
    %1011 = vmatprep.subr.mxu0 0.0
    %1012 = vmatpush1.msra.mxu0 0.0
    %1013 = vmatprep.subr.mxu0 0.0
    %1014 = vmatpush1.msra.mxu0 0.0
    %1015 = vmatprep.subr.mxu0 0.0
    %1016 = vmatpush1.msra.mxu0 0.0
    %1017 = vmatprep.subr.mxu0 0.0
    %1018 = vmatpush1.msra.mxu0 0.0
    %1019 = vmatprep.subr.mxu0 0.0
    %1020 = vmatpush1.msra.mxu0 0.0
    %1021 = vmatprep.subr.mxu0 0.0
    %1022 = vmatpush1.msra.mxu0 0.0
    %1023 = vmatprep.subr.mxu0 0.0
    %1024 = vmatpush1.msra.mxu0 0.0
    %1025 = vmatprep.subr.mxu0 0.0
    %1026 = vmatpush1.msra.mxu0 0.0
    %1027 = vmatprep.subr.mxu0 0.0
    %1028 = vmatpush1.msra.mxu0 0.0
    %1029 = vmatprep.subr.mxu0 0.0
    %1030 = vmatpush1.msra.mxu0 0.0
    %1031 = vmatprep.subr.mxu0 0.0
    %1032 = vmatpush1.msra.mxu0 0.0
    %1033 = vmatprep.subr.mxu0 0.0
    %1034 = vmatpush1.msra.mxu0 0.0
    %1035 = vmatprep.subr.mxu0 0.0
    %1036 = vmatpush1.msra.mxu0 0.0
    %1037 = vmatprep.subr.mxu0 0.0
    %1038 = vmatpush1.msra.mxu0 0.0
    %1039 = vmatprep.subr.mxu0 0.0
    %1040 = vmatpush1.msra.mxu0 0.0
    %1041 = vmatprep.mubr.f32.mxu0 0.0
    %1042 = vmatmul.mubr.f32.gmra.mrb[0].mxu0 %v66
    %v1043 = vpop.f32.mrb[0].mxu0
    %v1044 = vadd.f32 0.0, %v1043
    %v1045 = vpop.f32.mrb[0].mxu0
    %v1046 = vadd.f32 0.0, %v1045
    %1047 = vdwg.mxu0
    %v1048 = vmul.f32 %v1044, %v150
    %v1049 = vmul.f32 %v1046, %v154
    %v1050 = vsel %vm68, %v961, 0
    %v1052 = vsel %vm68, %v963, 0
    %1054 = vmatprep.subr.mxu0 %v1052
    %1055 = vmatpush1.msra.mxu0 %v1050
    %1056 = vmatprep.subr.mxu0 0.0
    %1057 = vmatpush1.msra.mxu0 0.0
    %1058 = vmatprep.subr.mxu0 0.0
    %1059 = vmatpush1.msra.mxu0 0.0
    %1060 = vmatprep.subr.mxu0 0.0
    %1061 = vmatpush1.msra.mxu0 0.0
    %1062 = vmatprep.subr.mxu0 0.0
    %1063 = vmatpush1.msra.mxu0 0.0
    %1064 = vmatprep.subr.mxu0 0.0
    %1065 = vmatpush1.msra.mxu0 0.0
    %1066 = vmatprep.subr.mxu0 0.0
    %1067 = vmatpush1.msra.mxu0 0.0
    %1068 = vmatprep.subr.mxu0 0.0
    %1069 = vmatpush1.msra.mxu0 0.0
    %1070 = vmatprep.subr.mxu0 0.0
    %1071 = vmatpush1.msra.mxu0 0.0
    %1072 = vmatprep.subr.mxu0 0.0
    %1073 = vmatpush1.msra.mxu0 0.0
    %1074 = vmatprep.subr.mxu0 0.0
    %1075 = vmatpush1.msra.mxu0 0.0
    %1076 = vmatprep.subr.mxu0 0.0
    %1077 = vmatpush1.msra.mxu0 0.0
    %1078 = vmatprep.subr.mxu0 0.0
    %1079 = vmatpush1.msra.mxu0 0.0
    %1080 = vmatprep.subr.mxu0 0.0
    %1081 = vmatpush1.msra.mxu0 0.0
    %1082 = vmatprep.subr.mxu0 0.0
    %1083 = vmatpush1.msra.mxu0 0.0
    %1084 = vmatprep.subr.mxu0 0.0
    %1085 = vmatpush1.msra.mxu0 0.0
    %1086 = vmatprep.subr.mxu0 0.0
    %1087 = vmatpush1.msra.mxu0 0.0
    %1088 = vmatprep.subr.mxu0 0.0
    %1089 = vmatpush1.msra.mxu0 0.0
    %1090 = vmatprep.subr.mxu0 0.0
    %1091 = vmatpush1.msra.mxu0 0.0
    %1092 = vmatprep.subr.mxu0 0.0
    %1093 = vmatpush1.msra.mxu0 0.0
    %1094 = vmatprep.subr.mxu0 0.0
    %1095 = vmatpush1.msra.mxu0 0.0
    %1096 = vmatprep.subr.mxu0 0.0
    %1097 = vmatpush1.msra.mxu0 0.0
    %1098 = vmatprep.subr.mxu0 0.0
    %1099 = vmatpush1.msra.mxu0 0.0
    %1100 = vmatprep.subr.mxu0 0.0
    %1101 = vmatpush1.msra.mxu0 0.0
    %1102 = vmatprep.subr.mxu0 0.0
    %1103 = vmatpush1.msra.mxu0 0.0
    %1104 = vmatprep.subr.mxu0 0.0
    %1105 = vmatpush1.msra.mxu0 0.0
    %1106 = vmatprep.subr.mxu0 0.0
    %1107 = vmatpush1.msra.mxu0 0.0
    %1108 = vmatprep.subr.mxu0 0.0
    %1109 = vmatpush1.msra.mxu0 0.0
    %1110 = vmatprep.subr.mxu0 0.0
    %1111 = vmatpush1.msra.mxu0 0.0
    %1112 = vmatprep.subr.mxu0 0.0
    %1113 = vmatpush1.msra.mxu0 0.0
    %1114 = vmatprep.subr.mxu0 0.0
    %1115 = vmatpush1.msra.mxu0 0.0
    %1116 = vmatprep.subr.mxu0 0.0
    %1117 = vmatpush1.msra.mxu0 0.0
    %1118 = vmatprep.mubr.f32.mxu0 0.0
    %1119 = vmatmul.mubr.f32.gmra.mrb[0].mxu0 %v160
    %v1120 = vpop.f32.mrb[0].mxu0
    %v1121 = vadd.f32 %v1048, %v1120
    %v1122 = vpop.f32.mrb[0].mxu0
    %v1123 = vadd.f32 %v1049, %v1122
    %1124 = vdwg.mxu0
    %1125 = vrot.lane.b32.xlu0 %v961, 16
    %v1126 = vpop.permute.xlu0 %1125
    %1127 = vrot.lane.b32.xlu0 %v963, 16
    %v1128 = vpop.permute.xlu0 %1127
    %v1129 = vsel %vm241, %v1126, %v1128
    %v1130 = vsel %vm241, %v1128, %v1126
    %v1132 = vsel %vm68, %v1130, 0
    %v1135 = vsel %vm68, %v1129, 0
    %1137 = vmatprep.subr.mxu0 %v1135
    %1138 = vmatpush1.msra.mxu0 %v1132
    %1139 = vmatprep.subr.mxu0 0.0
    %1140 = vmatpush1.msra.mxu0 0.0
    %1141 = vmatprep.subr.mxu0 0.0
    %1142 = vmatpush1.msra.mxu0 0.0
    %1143 = vmatprep.subr.mxu0 0.0
    %1144 = vmatpush1.msra.mxu0 0.0
    %1145 = vmatprep.subr.mxu0 0.0
    %1146 = vmatpush1.msra.mxu0 0.0
    %1147 = vmatprep.subr.mxu0 0.0
    %1148 = vmatpush1.msra.mxu0 0.0
    %1149 = vmatprep.subr.mxu0 0.0
    %1150 = vmatpush1.msra.mxu0 0.0
    %1151 = vmatprep.subr.mxu0 0.0
    %1152 = vmatpush1.msra.mxu0 0.0
    %1153 = vmatprep.subr.mxu0 0.0
    %1154 = vmatpush1.msra.mxu0 0.0
    %1155 = vmatprep.subr.mxu0 0.0
    %1156 = vmatpush1.msra.mxu0 0.0
    %1157 = vmatprep.subr.mxu0 0.0
    %1158 = vmatpush1.msra.mxu0 0.0
    %1159 = vmatprep.subr.mxu0 0.0
    %1160 = vmatpush1.msra.mxu0 0.0
    %1161 = vmatprep.subr.mxu0 0.0
    %1162 = vmatpush1.msra.mxu0 0.0
    %1163 = vmatprep.subr.mxu0 0.0
    %1164 = vmatpush1.msra.mxu0 0.0
    %1165 = vmatprep.subr.mxu0 0.0
    %1166 = vmatpush1.msra.mxu0 0.0
    %1167 = vmatprep.subr.mxu0 0.0
    %1168 = vmatpush1.msra.mxu0 0.0
    %1169 = vmatprep.subr.mxu0 0.0
    %1170 = vmatpush1.msra.mxu0 0.0
    %1171 = vmatprep.subr.mxu0 0.0
    %1172 = vmatpush1.msra.mxu0 0.0
    %1173 = vmatprep.subr.mxu0 0.0
    %1174 = vmatpush1.msra.mxu0 0.0
    %1175 = vmatprep.subr.mxu0 0.0
    %1176 = vmatpush1.msra.mxu0 0.0
    %1177 = vmatprep.subr.mxu0 0.0
    %1178 = vmatpush1.msra.mxu0 0.0
    %1179 = vmatprep.subr.mxu0 0.0
    %1180 = vmatpush1.msra.mxu0 0.0
    %1181 = vmatprep.subr.mxu0 0.0
    %1182 = vmatpush1.msra.mxu0 0.0
    %1183 = vmatprep.subr.mxu0 0.0
    %1184 = vmatpush1.msra.mxu0 0.0
    %1185 = vmatprep.subr.mxu0 0.0
    %1186 = vmatpush1.msra.mxu0 0.0
    %1187 = vmatprep.subr.mxu0 0.0
    %1188 = vmatpush1.msra.mxu0 0.0
    %1189 = vmatprep.subr.mxu0 0.0
    %1190 = vmatpush1.msra.mxu0 0.0
    %1191 = vmatprep.subr.mxu0 0.0
    %1192 = vmatpush1.msra.mxu0 0.0
    %1193 = vmatprep.subr.mxu0 0.0
    %1194 = vmatpush1.msra.mxu0 0.0
    %1195 = vmatprep.subr.mxu0 0.0
    %1196 = vmatpush1.msra.mxu0 0.0
    %1197 = vmatprep.subr.mxu0 0.0
    %1198 = vmatpush1.msra.mxu0 0.0
    %1199 = vmatprep.subr.mxu0 0.0
    %1200 = vmatpush1.msra.mxu0 0.0
    %1201 = vmatprep.mubr.f32.mxu0 0.0
    %1202 = vmatmul.mubr.f32.gmra.mrb[0].mxu0 %v245
    %v1203 = vpop.f32.mrb[0].mxu0
    %v1204 = vadd.f32 0.0, %v1203
    %v1205 = vpop.f32.mrb[0].mxu0
    %v1206 = vadd.f32 0.0, %v1205
    %1207 = vdwg.mxu0
    %v1208 = vmul.f32 %v1204, %v328
    %v1209 = vmul.f32 %v1206, %v332
    %v1210 = vadd.f32 %v1121, %v1208
    %v1211 = vadd.f32 %v1123, %v1209
    %1212 = vrot.lane.b32.xlu0 %v961, 15
    %v1213 = vpop.permute.xlu0 %1212
    %1214 = vrot.lane.b32.xlu0 %v963, 15
    %v1215 = vpop.permute.xlu0 %1214
    %v1216 = vsel %vm343, %v1213, %v1215
    %v1217 = vsel %vm343, %v1215, %v1213
    %v1219 = vsel %vm68, %v1217, 0
    %v1222 = vsel %vm68, %v1216, 0
    %1224 = vmatprep.subr.mxu0 %v1222
    %1225 = vmatpush1.msra.mxu0 %v1219
    %1226 = vmatprep.subr.mxu0 0.0
    %1227 = vmatpush1.msra.mxu0 0.0
    %1228 = vmatprep.subr.mxu0 0.0
    %1229 = vmatpush1.msra.mxu0 0.0
    %1230 = vmatprep.subr.mxu0 0.0
    %1231 = vmatpush1.msra.mxu0 0.0
    %1232 = vmatprep.subr.mxu0 0.0
    %1233 = vmatpush1.msra.mxu0 0.0
    %1234 = vmatprep.subr.mxu0 0.0
    %1235 = vmatpush1.msra.mxu0 0.0
    %1236 = vmatprep.subr.mxu0 0.0
    %1237 = vmatpush1.msra.mxu0 0.0
    %1238 = vmatprep.subr.mxu0 0.0
    %1239 = vmatpush1.msra.mxu0 0.0
    %1240 = vmatprep.subr.mxu0 0.0
    %1241 = vmatpush1.msra.mxu0 0.0
    %1242 = vmatprep.subr.mxu0 0.0
    %1243 = vmatpush1.msra.mxu0 0.0
    %1244 = vmatprep.subr.mxu0 0.0
    %1245 = vmatpush1.msra.mxu0 0.0
    %1246 = vmatprep.subr.mxu0 0.0
    %1247 = vmatpush1.msra.mxu0 0.0
    %1248 = vmatprep.subr.mxu0 0.0
    %1249 = vmatpush1.msra.mxu0 0.0
    %1250 = vmatprep.subr.mxu0 0.0
    %1251 = vmatpush1.msra.mxu0 0.0
    %1252 = vmatprep.subr.mxu0 0.0
    %1253 = vmatpush1.msra.mxu0 0.0
    %1254 = vmatprep.subr.mxu0 0.0
    %1255 = vmatpush1.msra.mxu0 0.0
    %1256 = vmatprep.subr.mxu0 0.0
    %1257 = vmatpush1.msra.mxu0 0.0
    %1258 = vmatprep.subr.mxu0 0.0
    %1259 = vmatpush1.msra.mxu0 0.0
    %1260 = vmatprep.subr.mxu0 0.0
    %1261 = vmatpush1.msra.mxu0 0.0
    %1262 = vmatprep.subr.mxu0 0.0
    %1263 = vmatpush1.msra.mxu0 0.0
    %1264 = vmatprep.subr.mxu0 0.0
    %1265 = vmatpush1.msra.mxu0 0.0
    %1266 = vmatprep.subr.mxu0 0.0
    %1267 = vmatpush1.msra.mxu0 0.0
    %1268 = vmatprep.subr.mxu0 0.0
    %1269 = vmatpush1.msra.mxu0 0.0
    %1270 = vmatprep.subr.mxu0 0.0
    %1271 = vmatpush1.msra.mxu0 0.0
    %1272 = vmatprep.subr.mxu0 0.0
    %1273 = vmatpush1.msra.mxu0 0.0
    %1274 = vmatprep.subr.mxu0 0.0
    %1275 = vmatpush1.msra.mxu0 0.0
    %1276 = vmatprep.subr.mxu0 0.0
    %1277 = vmatpush1.msra.mxu0 0.0
    %1278 = vmatprep.subr.mxu0 0.0
    %1279 = vmatpush1.msra.mxu0 0.0
    %1280 = vmatprep.subr.mxu0 0.0
    %1281 = vmatpush1.msra.mxu0 0.0
    %1282 = vmatprep.subr.mxu0 0.0
    %1283 = vmatpush1.msra.mxu0 0.0
    %1284 = vmatprep.subr.mxu0 0.0
    %1285 = vmatpush1.msra.mxu0 0.0
    %1286 = vmatprep.subr.mxu0 0.0
    %1287 = vmatpush1.msra.mxu0 0.0
    %1288 = vmatprep.mubr.f32.mxu0 0.0
    %1289 = vmatmul.mubr.f32.gmra.mrb[0].mxu0 %v347
    %v1290 = vpop.f32.mrb[0].mxu0
    %v1291 = vadd.f32 0.0, %v1290
    %v1292 = vpop.f32.mrb[0].mxu0
    %v1293 = vadd.f32 0.0, %v1292
    %1294 = vdwg.mxu0
    %v1295 = vmul.f32 %v1291, %v430
    %v1296 = vmul.f32 %v1293, %v434
    %v1297 = vadd.f32 %v1210, %v1295
    %v1298 = vadd.f32 %v1211, %v1296
    %1299 = vrot.lane.b32.xlu0 %v961, 1
    %v1300 = vpop.permute.xlu0 %1299
    %1301 = vrot.lane.b32.xlu0 %v963, 1
    %v1302 = vpop.permute.xlu0 %1301
    %v1303 = vsel %vm445, %v1300, %v1302
    %v1304 = vsel %vm445, %v1302, %v1300
    %v1306 = vsel %vm68, %v1304, 0
    %v1309 = vsel %vm68, %v1303, 0
    %1311 = vmatprep.subr.mxu0 %v1309
    %1312 = vmatpush1.msra.mxu0 %v1306
    %1313 = vmatprep.subr.mxu0 0.0
    %1314 = vmatpush1.msra.mxu0 0.0
    %1315 = vmatprep.subr.mxu0 0.0
    %1316 = vmatpush1.msra.mxu0 0.0
    %1317 = vmatprep.subr.mxu0 0.0
    %1318 = vmatpush1.msra.mxu0 0.0
    %1319 = vmatprep.subr.mxu0 0.0
    %1320 = vmatpush1.msra.mxu0 0.0
    %1321 = vmatprep.subr.mxu0 0.0
    %1322 = vmatpush1.msra.mxu0 0.0
    %1323 = vmatprep.subr.mxu0 0.0
    %1324 = vmatpush1.msra.mxu0 0.0
    %1325 = vmatprep.subr.mxu0 0.0
    %1326 = vmatpush1.msra.mxu0 0.0
    %1327 = vmatprep.subr.mxu0 0.0
    %1328 = vmatpush1.msra.mxu0 0.0
    %1329 = vmatprep.subr.mxu0 0.0
    %1330 = vmatpush1.msra.mxu0 0.0
    %1331 = vmatprep.subr.mxu0 0.0
    %1332 = vmatpush1.msra.mxu0 0.0
    %1333 = vmatprep.subr.mxu0 0.0
    %1334 = vmatpush1.msra.mxu0 0.0
    %1335 = vmatprep.subr.mxu0 0.0
    %1336 = vmatpush1.msra.mxu0 0.0
    %1337 = vmatprep.subr.mxu0 0.0
    %1338 = vmatpush1.msra.mxu0 0.0
    %1339 = vmatprep.subr.mxu0 0.0
    %1340 = vmatpush1.msra.mxu0 0.0
    %1341 = vmatprep.subr.mxu0 0.0
    %1342 = vmatpush1.msra.mxu0 0.0
    %1343 = vmatprep.subr.mxu0 0.0
    %1344 = vmatpush1.msra.mxu0 0.0
    %1345 = vmatprep.subr.mxu0 0.0
    %1346 = vmatpush1.msra.mxu0 0.0
    %1347 = vmatprep.subr.mxu0 0.0
    %1348 = vmatpush1.msra.mxu0 0.0
    %1349 = vmatprep.subr.mxu0 0.0
    %1350 = vmatpush1.msra.mxu0 0.0
    %1351 = vmatprep.subr.mxu0 0.0
    %1352 = vmatpush1.msra.mxu0 0.0
    %1353 = vmatprep.subr.mxu0 0.0
    %1354 = vmatpush1.msra.mxu0 0.0
    %1355 = vmatprep.subr.mxu0 0.0
    %1356 = vmatpush1.msra.mxu0 0.0
    %1357 = vmatprep.subr.mxu0 0.0
    %1358 = vmatpush1.msra.mxu0 0.0
    %1359 = vmatprep.subr.mxu0 0.0
    %1360 = vmatpush1.msra.mxu0 0.0
    %1361 = vmatprep.subr.mxu0 0.0
    %1362 = vmatpush1.msra.mxu0 0.0
    %1363 = vmatprep.subr.mxu0 0.0
    %1364 = vmatpush1.msra.mxu0 0.0
    %1365 = vmatprep.subr.mxu0 0.0
    %1366 = vmatpush1.msra.mxu0 0.0
    %1367 = vmatprep.subr.mxu0 0.0
    %1368 = vmatpush1.msra.mxu0 0.0
    %1369 = vmatprep.subr.mxu0 0.0
    %1370 = vmatpush1.msra.mxu0 0.0
    %1371 = vmatprep.subr.mxu0 0.0
    %1372 = vmatpush1.msra.mxu0 0.0
    %1373 = vmatprep.subr.mxu0 0.0
    %1374 = vmatpush1.msra.mxu0 0.0
    %1375 = vmatprep.mubr.f32.mxu0 0.0
    %1376 = vmatmul.mubr.f32.gmra.mrb[0].mxu0 %v449
    %v1377 = vpop.f32.mrb[0].mxu0
    %v1378 = vadd.f32 0.0, %v1377
    %v1379 = vpop.f32.mrb[0].mxu0
    %v1380 = vadd.f32 0.0, %v1379
    %1381 = vdwg.mxu0
    %v1382 = vmul.f32 %v1378, %v532
    %v1383 = vmul.f32 %v1380, %v536
    %v1384 = vadd.f32 %v1297, %v1382
    %v1385 = vadd.f32 %v1298, %v1383
    %1386 = vrot.lane.b32.xlu0 %v961, 127
    %v1387 = vpop.permute.xlu0 %1386
    %1388 = vrot.lane.b32.xlu0 %v963, 127
    %v1389 = vpop.permute.xlu0 %1388
    %v1390 = vsel %vm547, %v1387, %v1389
    %v1391 = vsel %vm547, %v1389, %v1387
    %v1393 = vsel %vm68, %v1390, 0
    %v1396 = vsel %vm68, %v1391, 0
    %1398 = vmatprep.subr.mxu0 %v1396
    %1399 = vmatpush1.msra.mxu0 %v1393
    %1400 = vmatprep.subr.mxu0 0.0
    %1401 = vmatpush1.msra.mxu0 0.0
    %1402 = vmatprep.subr.mxu0 0.0
    %1403 = vmatpush1.msra.mxu0 0.0
    %1404 = vmatprep.subr.mxu0 0.0
    %1405 = vmatpush1.msra.mxu0 0.0
    %1406 = vmatprep.subr.mxu0 0.0
    %1407 = vmatpush1.msra.mxu0 0.0
    %1408 = vmatprep.subr.mxu0 0.0
    %1409 = vmatpush1.msra.mxu0 0.0
    %1410 = vmatprep.subr.mxu0 0.0
    %1411 = vmatpush1.msra.mxu0 0.0
    %1412 = vmatprep.subr.mxu0 0.0
    %1413 = vmatpush1.msra.mxu0 0.0
    %1414 = vmatprep.subr.mxu0 0.0
    %1415 = vmatpush1.msra.mxu0 0.0
    %1416 = vmatprep.subr.mxu0 0.0
    %1417 = vmatpush1.msra.mxu0 0.0
    %1418 = vmatprep.subr.mxu0 0.0
    %1419 = vmatpush1.msra.mxu0 0.0
    %1420 = vmatprep.subr.mxu0 0.0
    %1421 = vmatpush1.msra.mxu0 0.0
    %1422 = vmatprep.subr.mxu0 0.0
    %1423 = vmatpush1.msra.mxu0 0.0
    %1424 = vmatprep.subr.mxu0 0.0
    %1425 = vmatpush1.msra.mxu0 0.0
    %1426 = vmatprep.subr.mxu0 0.0
    %1427 = vmatpush1.msra.mxu0 0.0
    %1428 = vmatprep.subr.mxu0 0.0
    %1429 = vmatpush1.msra.mxu0 0.0
    %1430 = vmatprep.subr.mxu0 0.0
    %1431 = vmatpush1.msra.mxu0 0.0
    %1432 = vmatprep.subr.mxu0 0.0
    %1433 = vmatpush1.msra.mxu0 0.0
    %1434 = vmatprep.subr.mxu0 0.0
    %1435 = vmatpush1.msra.mxu0 0.0
    %1436 = vmatprep.subr.mxu0 0.0
    %1437 = vmatpush1.msra.mxu0 0.0
    %1438 = vmatprep.subr.mxu0 0.0
    %1439 = vmatpush1.msra.mxu0 0.0
    %1440 = vmatprep.subr.mxu0 0.0
    %1441 = vmatpush1.msra.mxu0 0.0
    %1442 = vmatprep.subr.mxu0 0.0
    %1443 = vmatpush1.msra.mxu0 0.0
    %1444 = vmatprep.subr.mxu0 0.0
    %1445 = vmatpush1.msra.mxu0 0.0
    %1446 = vmatprep.subr.mxu0 0.0
    %1447 = vmatpush1.msra.mxu0 0.0
    %1448 = vmatprep.subr.mxu0 0.0
    %1449 = vmatpush1.msra.mxu0 0.0
    %1450 = vmatprep.subr.mxu0 0.0
    %1451 = vmatpush1.msra.mxu0 0.0
    %1452 = vmatprep.subr.mxu0 0.0
    %1453 = vmatpush1.msra.mxu0 0.0
    %1454 = vmatprep.subr.mxu0 0.0
    %1455 = vmatpush1.msra.mxu0 0.0
    %1456 = vmatprep.subr.mxu0 0.0
    %1457 = vmatpush1.msra.mxu0 0.0
    %1458 = vmatprep.subr.mxu0 0.0
    %1459 = vmatpush1.msra.mxu0 0.0
    %1460 = vmatprep.subr.mxu0 0.0
    %1461 = vmatpush1.msra.mxu0 0.0
    %1462 = vmatprep.mubr.f32.mxu0 0.0
    %1463 = vmatmul.mubr.f32.gmra.mrb[0].mxu0 %v551
    %v1464 = vpop.f32.mrb[0].mxu0
    %v1465 = vadd.f32 0.0, %v1464
    %v1466 = vpop.f32.mrb[0].mxu0
    %v1467 = vadd.f32 0.0, %v1466
    %1468 = vdwg.mxu0
    %v1469 = vmul.f32 %v1465, %v634
    %v1470 = vmul.f32 %v1467, %v638
    %v1471 = vadd.f32 %v1384, %v1469
    %v1472 = vadd.f32 %v1385, %v1470
    %1473 = vrot.lane.b32.xlu0 %v961, 113
    %v1474 = vpop.permute.xlu0 %1473
    %1475 = vrot.lane.b32.xlu0 %v963, 113
    %v1476 = vpop.permute.xlu0 %1475
    %v1477 = vsel %vm649, %v1474, %v1476
    %v1478 = vsel %vm649, %v1476, %v1474
    %v1480 = vsel %vm68, %v1477, 0
    %v1483 = vsel %vm68, %v1478, 0
    %1485 = vmatprep.subr.mxu0 %v1483
    %1486 = vmatpush1.msra.mxu0 %v1480
    %1487 = vmatprep.subr.mxu0 0.0
    %1488 = vmatpush1.msra.mxu0 0.0
    %1489 = vmatprep.subr.mxu0 0.0
    %1490 = vmatpush1.msra.mxu0 0.0
    %1491 = vmatprep.subr.mxu0 0.0
    %1492 = vmatpush1.msra.mxu0 0.0
    %1493 = vmatprep.subr.mxu0 0.0
    %1494 = vmatpush1.msra.mxu0 0.0
    %1495 = vmatprep.subr.mxu0 0.0
    %1496 = vmatpush1.msra.mxu0 0.0
    %1497 = vmatprep.subr.mxu0 0.0
    %1498 = vmatpush1.msra.mxu0 0.0
    %1499 = vmatprep.subr.mxu0 0.0
    %1500 = vmatpush1.msra.mxu0 0.0
    %1501 = vmatprep.subr.mxu0 0.0
    %1502 = vmatpush1.msra.mxu0 0.0
    %1503 = vmatprep.subr.mxu0 0.0
    %1504 = vmatpush1.msra.mxu0 0.0
    %1505 = vmatprep.subr.mxu0 0.0
    %1506 = vmatpush1.msra.mxu0 0.0
    %1507 = vmatprep.subr.mxu0 0.0
    %1508 = vmatpush1.msra.mxu0 0.0
    %1509 = vmatprep.subr.mxu0 0.0
    %1510 = vmatpush1.msra.mxu0 0.0
    %1511 = vmatprep.subr.mxu0 0.0
    %1512 = vmatpush1.msra.mxu0 0.0
    %1513 = vmatprep.subr.mxu0 0.0
    %1514 = vmatpush1.msra.mxu0 0.0
    %1515 = vmatprep.subr.mxu0 0.0
    %1516 = vmatpush1.msra.mxu0 0.0
    %1517 = vmatprep.subr.mxu0 0.0
    %1518 = vmatpush1.msra.mxu0 0.0
    %1519 = vmatprep.subr.mxu0 0.0
    %1520 = vmatpush1.msra.mxu0 0.0
    %1521 = vmatprep.subr.mxu0 0.0
    %1522 = vmatpush1.msra.mxu0 0.0
    %1523 = vmatprep.subr.mxu0 0.0
    %1524 = vmatpush1.msra.mxu0 0.0
    %1525 = vmatprep.subr.mxu0 0.0
    %1526 = vmatpush1.msra.mxu0 0.0
    %1527 = vmatprep.subr.mxu0 0.0
    %1528 = vmatpush1.msra.mxu0 0.0
    %1529 = vmatprep.subr.mxu0 0.0
    %1530 = vmatpush1.msra.mxu0 0.0
    %1531 = vmatprep.subr.mxu0 0.0
    %1532 = vmatpush1.msra.mxu0 0.0
    %1533 = vmatprep.subr.mxu0 0.0
    %1534 = vmatpush1.msra.mxu0 0.0
    %1535 = vmatprep.subr.mxu0 0.0
    %1536 = vmatpush1.msra.mxu0 0.0
    %1537 = vmatprep.subr.mxu0 0.0
    %1538 = vmatpush1.msra.mxu0 0.0
    %1539 = vmatprep.subr.mxu0 0.0
    %1540 = vmatpush1.msra.mxu0 0.0
    %1541 = vmatprep.subr.mxu0 0.0
    %1542 = vmatpush1.msra.mxu0 0.0
    %1543 = vmatprep.subr.mxu0 0.0
    %1544 = vmatpush1.msra.mxu0 0.0
    %1545 = vmatprep.subr.mxu0 0.0
    %1546 = vmatpush1.msra.mxu0 0.0
    %1547 = vmatprep.subr.mxu0 0.0
    %1548 = vmatpush1.msra.mxu0 0.0
    %1549 = vmatprep.mubr.f32.mxu0 0.0
    %1550 = vmatmul.mubr.f32.gmra.mrb[0].mxu0 %v653
    %v1551 = vpop.f32.mrb[0].mxu0
    %v1552 = vadd.f32 0.0, %v1551
    %v1553 = vpop.f32.mrb[0].mxu0
    %v1554 = vadd.f32 0.0, %v1553
    %1555 = vdwg.mxu0
    %v1556 = vmul.f32 %v1552, %v736
    %v1557 = vmul.f32 %v1554, %v740
    %v1558 = vadd.f32 %v1471, %v1556
    %v1559 = vadd.f32 %v1472, %v1557
    %1560 = vrot.lane.b32.xlu0 %v961, 112
    %v1561 = vpop.permute.xlu0 %1560
    %1562 = vrot.lane.b32.xlu0 %v963, 112
    %v1563 = vpop.permute.xlu0 %1562
    %v1564 = vsel %vm751, %v1561, %v1563
    %v1565 = vsel %vm751, %v1563, %v1561
    %v1567 = vsel %vm68, %v1564, 0
    %v1570 = vsel %vm68, %v1565, 0
    %1572 = vmatprep.subr.mxu0 %v1570
    %1573 = vmatpush1.msra.mxu0 %v1567
    %1574 = vmatprep.subr.mxu0 0.0
    %1575 = vmatpush1.msra.mxu0 0.0
    %1576 = vmatprep.subr.mxu0 0.0
    %1577 = vmatpush1.msra.mxu0 0.0
    %1578 = vmatprep.subr.mxu0 0.0
    %1579 = vmatpush1.msra.mxu0 0.0
    %1580 = vmatprep.subr.mxu0 0.0
    %1581 = vmatpush1.msra.mxu0 0.0
    %1582 = vmatprep.subr.mxu0 0.0
    %1583 = vmatpush1.msra.mxu0 0.0
    %1584 = vmatprep.subr.mxu0 0.0
    %1585 = vmatpush1.msra.mxu0 0.0
    %1586 = vmatprep.subr.mxu0 0.0
    %1587 = vmatpush1.msra.mxu0 0.0
    %1588 = vmatprep.subr.mxu0 0.0
    %1589 = vmatpush1.msra.mxu0 0.0
    %1590 = vmatprep.subr.mxu0 0.0
    %1591 = vmatpush1.msra.mxu0 0.0
    %1592 = vmatprep.subr.mxu0 0.0
    %1593 = vmatpush1.msra.mxu0 0.0
    %1594 = vmatprep.subr.mxu0 0.0
    %1595 = vmatpush1.msra.mxu0 0.0
    %1596 = vmatprep.subr.mxu0 0.0
    %1597 = vmatpush1.msra.mxu0 0.0
    %1598 = vmatprep.subr.mxu0 0.0
    %1599 = vmatpush1.msra.mxu0 0.0
    %1600 = vmatprep.subr.mxu0 0.0
    %1601 = vmatpush1.msra.mxu0 0.0
    %1602 = vmatprep.subr.mxu0 0.0
    %1603 = vmatpush1.msra.mxu0 0.0
    %1604 = vmatprep.subr.mxu0 0.0
    %1605 = vmatpush1.msra.mxu0 0.0
    %1606 = vmatprep.subr.mxu0 0.0
    %1607 = vmatpush1.msra.mxu0 0.0
    %1608 = vmatprep.subr.mxu0 0.0
    %1609 = vmatpush1.msra.mxu0 0.0
    %1610 = vmatprep.subr.mxu0 0.0
    %1611 = vmatpush1.msra.mxu0 0.0
    %1612 = vmatprep.subr.mxu0 0.0
    %1613 = vmatpush1.msra.mxu0 0.0
    %1614 = vmatprep.subr.mxu0 0.0
    %1615 = vmatpush1.msra.mxu0 0.0
    %1616 = vmatprep.subr.mxu0 0.0
    %1617 = vmatpush1.msra.mxu0 0.0
    %1618 = vmatprep.subr.mxu0 0.0
    %1619 = vmatpush1.msra.mxu0 0.0
    %1620 = vmatprep.subr.mxu0 0.0
    %1621 = vmatpush1.msra.mxu0 0.0
    %1622 = vmatprep.subr.mxu0 0.0
    %1623 = vmatpush1.msra.mxu0 0.0
    %1624 = vmatprep.subr.mxu0 0.0
    %1625 = vmatpush1.msra.mxu0 0.0
    %1626 = vmatprep.subr.mxu0 0.0
    %1627 = vmatpush1.msra.mxu0 0.0
    %1628 = vmatprep.subr.mxu0 0.0
    %1629 = vmatpush1.msra.mxu0 0.0
    %1630 = vmatprep.subr.mxu0 0.0
    %1631 = vmatpush1.msra.mxu0 0.0
    %1632 = vmatprep.subr.mxu0 0.0
    %1633 = vmatpush1.msra.mxu0 0.0
    %1634 = vmatprep.subr.mxu0 0.0
    %1635 = vmatpush1.msra.mxu0 0.0
    %1636 = vmatprep.mubr.f32.mxu0 0.0
    %1637 = vmatmul.mubr.f32.gmra.mrb[0].mxu0 %v755
    %v1638 = vpop.f32.mrb[0].mxu0
    %v1639 = vadd.f32 0.0, %v1638
    %v1640 = vpop.f32.mrb[0].mxu0
    %v1641 = vadd.f32 0.0, %v1640
    %1642 = vdwg.mxu0
    %v1643 = vmul.f32 %v1639, %v838
    %v1644 = vmul.f32 %v1641, %v842
    %v1645 = vadd.f32 %v1558, %v1643
    %v1646 = vadd.f32 %v1559, %v1644
    %1647 = vrot.lane.b32.xlu0 %v961, 111
    %v1648 = vpop.permute.xlu0 %1647
    %1649 = vrot.lane.b32.xlu0 %v963, 111
    %v1650 = vpop.permute.xlu0 %1649
    %v1651 = vsel %vm853, %v1648, %v1650
    %v1652 = vsel %vm853, %v1650, %v1648
    %v1654 = vsel %vm68, %v1651, 0
    %v1657 = vsel %vm68, %v1652, 0
    %1659 = vmatprep.subr.mxu0 %v1657
    %1660 = vmatpush1.msra.mxu0 %v1654
    %1661 = vmatprep.subr.mxu0 0.0
    %1662 = vmatpush1.msra.mxu0 0.0
    %1663 = vmatprep.subr.mxu0 0.0
    %1664 = vmatpush1.msra.mxu0 0.0
    %1665 = vmatprep.subr.mxu0 0.0
    %1666 = vmatpush1.msra.mxu0 0.0
    %1667 = vmatprep.subr.mxu0 0.0
    %1668 = vmatpush1.msra.mxu0 0.0
    %1669 = vmatprep.subr.mxu0 0.0
    %1670 = vmatpush1.msra.mxu0 0.0
    %1671 = vmatprep.subr.mxu0 0.0
    %1672 = vmatpush1.msra.mxu0 0.0
    %1673 = vmatprep.subr.mxu0 0.0
    %1674 = vmatpush1.msra.mxu0 0.0
    %1675 = vmatprep.subr.mxu0 0.0
    %1676 = vmatpush1.msra.mxu0 0.0
    %1677 = vmatprep.subr.mxu0 0.0
    %1678 = vmatpush1.msra.mxu0 0.0
    %1679 = vmatprep.subr.mxu0 0.0
    %1680 = vmatpush1.msra.mxu0 0.0
    %1681 = vmatprep.subr.mxu0 0.0
    %1682 = vmatpush1.msra.mxu0 0.0
    %1683 = vmatprep.subr.mxu0 0.0
    %1684 = vmatpush1.msra.mxu0 0.0
    %1685 = vmatprep.subr.mxu0 0.0
    %1686 = vmatpush1.msra.mxu0 0.0
    %1687 = vmatprep.subr.mxu0 0.0
    %1688 = vmatpush1.msra.mxu0 0.0
    %1689 = vmatprep.subr.mxu0 0.0
    %1690 = vmatpush1.msra.mxu0 0.0
    %1691 = vmatprep.subr.mxu0 0.0
    %1692 = vmatpush1.msra.mxu0 0.0
    %1693 = vmatprep.subr.mxu0 0.0
    %1694 = vmatpush1.msra.mxu0 0.0
    %1695 = vmatprep.subr.mxu0 0.0
    %1696 = vmatpush1.msra.mxu0 0.0
    %1697 = vmatprep.subr.mxu0 0.0
    %1698 = vmatpush1.msra.mxu0 0.0
    %1699 = vmatprep.subr.mxu0 0.0
    %1700 = vmatpush1.msra.mxu0 0.0
    %1701 = vmatprep.subr.mxu0 0.0
    %1702 = vmatpush1.msra.mxu0 0.0
    %1703 = vmatprep.subr.mxu0 0.0
    %1704 = vmatpush1.msra.mxu0 0.0
    %1705 = vmatprep.subr.mxu0 0.0
    %1706 = vmatpush1.msra.mxu0 0.0
    %1707 = vmatprep.subr.mxu0 0.0
    %1708 = vmatpush1.msra.mxu0 0.0
    %1709 = vmatprep.subr.mxu0 0.0
    %1710 = vmatpush1.msra.mxu0 0.0
    %1711 = vmatprep.subr.mxu0 0.0
    %1712 = vmatpush1.msra.mxu0 0.0
    %1713 = vmatprep.subr.mxu0 0.0
    %1714 = vmatpush1.msra.mxu0 0.0
    %1715 = vmatprep.subr.mxu0 0.0
    %1716 = vmatpush1.msra.mxu0 0.0
    %1717 = vmatprep.subr.mxu0 0.0
    %1718 = vmatpush1.msra.mxu0 0.0
    %1719 = vmatprep.subr.mxu0 0.0
    %1720 = vmatpush1.msra.mxu0 0.0
    %1721 = vmatprep.subr.mxu0 0.0
    %1722 = vmatpush1.msra.mxu0 0.0
    %1723 = vmatprep.mubr.f32.mxu0 0.0
    %1724 = vmatmul.mubr.f32.gmra.mrb[0].mxu0 %v857
    %v1725 = vpop.f32.mrb[0].mxu0
    %v1726 = vadd.f32 0.0, %v1725
    %v1727 = vpop.f32.mrb[0].mxu0
    %v1728 = vadd.f32 0.0, %v1727
    %1729 = vdwg.mxu0
    %v1730 = vmul.f32 %v1726, %v940
    %v1731 = vmul.f32 %v1728, %v944
    %v1732 = vadd.f32 %v1645, %v1730
    %v1733 = vadd.f32 %v1646, %v1731
    %v1734 = vadd.f32 %v1732, %v954
    %v1735 = vadd.f32 %v1733, %v954
    %s1736 = scalar_lea.vmem [#allocation2], 16
    %1737 = vst [vmem:[%s1736] sm:$0xff] %v1734
    %1738 = vst [vmem:[%s1736 + $0x8] sm:$0xff] %v1735
    // Predicated region
    $region18: #{tpu_custom_call.1} parent=1 // pred_check
      _
    $region19: #{tpu_custom_call.1} parent=1 // pred_check_branch
      %1740 = sbr.rel (0) target = $region21
    $region20: #{tpu_custom_call.1} parent=1 // pred_region
      %s1742 = ssub.s32 512, 512
      %1743 = vsyncadd [#allocation3], %s1742
      %s1744 = sshll.u32 [#allocation2], 4
      %s1745 = int_to_ptr.vmem [resolvable:$true] %s1744
      %1750 = dma.vmem_to_hbm [thread:$0]  %s1745, 512, %s4, [#allocation3], 256, 256, 16
    $region21: #{tpu_custom_call.1} parent=1 // pred_fallthru
      _
    // Predicated region
    $region22: #{tpu_custom_call.1} parent=1 // pred_check
      _
    $region23: #{tpu_custom_call.1} parent=1 // pred_check_branch
      %1752 = sbr.rel (0) target = $region25
    $region24: #{tpu_custom_call.1} parent=1 // pred_region
      %1753 = dma.done [#allocation3], 512
    $region25: #{tpu_custom_call.1} parent=1 // pred_fallthru
      _
    %1754 = vsyncpa [#allocation3], 1

</llo_original>
